<compile_context>
chip_gen: v6e
topology: v6e:2x2x1
jax: 0.10.0
libtpu: 0.0.40
codegen_flags: <defaults>
</compile_context>

<pallas_src>
import functools

import jax
import jax.numpy as jnp
from jax import lax
from jax.experimental import pallas as pl
from jax.experimental.pallas import tpu as pltpu

_BN_EPS = 1e-5


# ---------------------------------------------------------------------------
# Fused Pallas kernel: conv1 + conv2 + convT(parity) with folded BN + ReLU.
# ---------------------------------------------------------------------------
def _fused_upsample_kernel(x_ref, w1_ref, b1_ref, w2_ref, b2_ref,
                           w3_ref, b3_ref, out_ref,
                           xpad_s, hpad_s, h3pad_s, *, H, W, Cin, C2):
    # x_ref   : (1, H, W*Cin)              lane-fused NHWC input tile
    # w1_ref  : (3, (W+2)*Cin, W*C2)       banded conv weights (one per row tap)
    # w2_ref  : (3, (W+2)*C2,  W*C2)
    # w3_ref  : (2, (W+1)*C2,  W*4*Cout)   parity-packed ConvTranspose weights
    # b*_ref  : (1, W*C) folded-BN biases tiled over the lane axis
    # out_ref : (1, H, W*4*Cout)           parity-packed upsampled output
    # xpad_s  : VMEM (H+2, (W+2)*Cin)      padded input
    # hpad_s  : VMEM (H+2, (W+2)*C2)       padded h1
    # h3pad_s : VMEM (H+1, (W+1)*C2)       padded h2 (dedicated, avoids stale halo)
    f32 = jnp.float32

    def conv_rows(buf, w_ref, n_taps):
        # Sum of full-lane-width matmuls, one per row tap; dx taps and the W
        # dimension are already folded into the banded weight matrices.
        acc = jnp.dot(buf[0:H, :], w_ref[0], preferred_element_type=f32)
        for dy in range(1, n_taps):
            acc = acc + jnp.dot(buf[dy:dy + H, :], w_ref[dy],
                                preferred_element_type=f32)
        return acc

    # ---- stage 1: Conv3x3(pad=1) + BN + ReLU            (Cin -> C2) --------
    # Halo-only zeroing; the interior is fully overwritten below.
    xpad_s[0:1, :] = jnp.zeros((1, (W + 2) * Cin), f32)
    xpad_s[H + 1:H + 2, :] = jnp.zeros((1, (W + 2) * Cin), f32)
    xpad_s[:, 0:Cin] = jnp.zeros((H + 2, Cin), f32)
    xpad_s[:, (W + 1) * Cin:(W + 2) * Cin] = jnp.zeros((H + 2, Cin), f32)
    xpad_s[1:H + 1, Cin:(W + 1) * Cin] = x_ref[0]
    h1 = jnp.maximum(conv_rows(xpad_s, w1_ref, 3) + b1_ref[...], 0.0)

    # ---- stage 2: Conv3x3(pad=1) + BN + ReLU            (C2 -> C2) ---------
    hpad_s[0:1, :] = jnp.zeros((1, (W + 2) * C2), f32)
    hpad_s[H + 1:H + 2, :] = jnp.zeros((1, (W + 2) * C2), f32)
    hpad_s[:, 0:C2] = jnp.zeros((H + 2, C2), f32)
    hpad_s[:, (W + 1) * C2:(W + 2) * C2] = jnp.zeros((H + 2, C2), f32)
    hpad_s[1:H + 1, C2:(W + 1) * C2] = h1
    h2 = jnp.maximum(conv_rows(hpad_s, w2_ref, 3) + b2_ref[...], 0.0)

    # ---- stage 3: ConvTranspose2d(3, s=2, p=1, op=1) + BN + ReLU -----------
    # Output-parity decomposition packed into the weight columns; only taps
    # (dy, dx) in {0,1}^2 of h2 contribute.  Bottom row / right column halo
    # is zero (dedicated buffer -> no stale data from stage 2's halo).
    h3pad_s[H:H + 1, :] = jnp.zeros((1, (W + 1) * C2), f32)
    h3pad_s[:, W * C2:(W + 1) * C2] = jnp.zeros((H + 1, C2), f32)
    h3pad_s[0:H, 0:W * C2] = h2
    r = jnp.maximum(conv_rows(h3pad_s, w3_ref, 2) + b3_ref[...], 0.0)

    out_ref[0] = r.astype(out_ref.dtype)


# ---------------------------------------------------------------------------
# Parameter folding / banded weight construction (plain JAX, traced once).
# ---------------------------------------------------------------------------
def _fold_bn(conv_bias, gamma, beta, mean, var):
    scale = gamma / jnp.sqrt(var + _BN_EPS)
    bias = beta + (conv_bias - mean) * scale
    return scale, bias


def _banded_conv_weights(w_oihw, scale, w_sp):
    # Conv2d weight (Cout, Cin, 3, 3) -> stacked (3, (w_sp+2)*Cin, w_sp*Cout)
    # banded matrices: matrix dy maps padded row i+dy (lane-fused (W+2)*Cin)
    # to output row i (lane-fused W*Cout).  BN scale folded into columns.
    cout, cin = w_oihw.shape[0], w_oihw.shape[1]
    ws = w_oihw * scale[:, None, None, None]
    mats = []
    for dy in range(3):
        t = jnp.zeros((w_sp + 2, cin, w_sp, cout), w_oihw.dtype)
        for dx in range(3):
            eye = jnp.eye(w_sp + 2, w_sp, k=-dx, dtype=w_oihw.dtype)
            blk = ws[:, :, dy, dx].T                     # (Cin, Cout)
            t = t + eye[:, None, :, None] * blk[None, :, None, :]
        mats.append(t.reshape((w_sp + 2) * cin, w_sp * cout))
    return jnp.stack(mats)


# (output parity, h2 tap offset) -> ConvTranspose kernel index; missing = zero.
_KTAB = {(0, 0): 1, (1, 0): 2, (1, 1): 0}


def _banded_convT_weights(w_iohw, scale, w_sp):
    # ConvTranspose2d weight (C2, Cout, 3, 3), stride 2, pad 1, out_pad 1 ->
    # stacked (2, (w_sp+1)*C2, w_sp*4*Cout).  Matrix dy maps h2 row m+dy to
    # parity-packed output row m; columns ordered (j, py, px, cout).
    c2, cout = w_iohw.shape[0], w_iohw.shape[1]
    ws = w_iohw * scale[None, :, None, None]
    mats = []
    for dy in range(2):
        t = jnp.zeros((w_sp + 1, c2, w_sp, 2, 2, cout), w_iohw.dtype)
        for dx in range(2):
            eye = jnp.eye(w_sp + 1, w_sp, k=-dx, dtype=w_iohw.dtype)
            for py in range(2):
                ky = _KTAB.get((py, dy))
                if ky is None:
                    continue
                for px in range(2):
                    kx = _KTAB.get((px, dx))
                    if kx is None:
                        continue
                    blk = ws[:, :, ky, kx]               # (C2, Cout)
                    t = t.at[:, :, :, py, px, :].add(
                        eye[:, None, :, None] * blk[None, :, None, :])
        mats.append(t.reshape((w_sp + 1) * c2, w_sp * 4 * cout))
    return jnp.stack(mats)


# ---------------------------------------------------------------------------
# Public forward (NCHW in / NCHW out, matching the PyTorch module).
# ---------------------------------------------------------------------------
def upsample_layer_forward(params, x_nchw, skip_nchw):
    n, cin, h, w = x_nchw.shape
    c2 = params["w1"].shape[0]
    cout = params["w3"].shape[1]

    # lane-fused NHWC input: (n, H, W*Cin)
    x = jnp.transpose(x_nchw, (0, 2, 3, 1)).astype(jnp.float32)
    x = x.reshape(n, h, w * cin)

    s1, b1 = _fold_bn(params["b1"], *params["bn1"])
    s2, b2 = _fold_bn(params["b2"], *params["bn2"])
    s3, b3 = _fold_bn(params["b3"], *params["bn3"])
    w1 = _banded_conv_weights(params["w1"], s1, w)       # (3, (w+2)*cin, w*c2)
    w2 = _banded_conv_weights(params["w2"], s2, w)       # (3, (w+2)*c2,  w*c2)
    w3 = _banded_convT_weights(params["w3"], s3, w)      # (2, (w+1)*c2,  w*4*cout)
    b1 = jnp.tile(b1, w)[None, :]                        # (1, w*c2)
    b2 = jnp.tile(b2, w)[None, :]                        # (1, w*c2)
    b3 = jnp.tile(b3, 4 * w)[None, :]                    # (1, w*4*cout)

    kernel = functools.partial(_fused_upsample_kernel,
                               H=h, W=w, Cin=cin, C2=c2)

    out = pl.pallas_call(
        kernel,
        out_shape=jax.ShapeDtypeStruct((n, h, w * 4 * cout), jnp.float32),
        grid_spec=pltpu.PrefetchScalarGridSpec(
            num_scalar_prefetch=0,
            grid=(n,),
            in_specs=[
                pl.BlockSpec((1, h, w * cin), lambda b: (b, 0, 0)),
                pl.BlockSpec((3, (w + 2) * cin, w * c2), lambda b: (0, 0, 0)),
                pl.BlockSpec((1, w * c2), lambda b: (0, 0)),
                pl.BlockSpec((3, (w + 2) * c2, w * c2), lambda b: (0, 0, 0)),
                pl.BlockSpec((1, w * c2), lambda b: (0, 0)),
                pl.BlockSpec((2, (w + 1) * c2, w * 4 * cout), lambda b: (0, 0, 0)),
                pl.BlockSpec((1, w * 4 * cout), lambda b: (0, 0)),
            ],
            out_specs=pl.BlockSpec((1, h, w * 4 * cout), lambda b: (b, 0, 0)),
            scratch_shapes=[
                pltpu.VMEM((h + 2, (w + 2) * cin), jnp.float32),   # padded x
                pltpu.VMEM((h + 2, (w + 2) * c2), jnp.float32),    # padded h1
                pltpu.VMEM((h + 1, (w + 1) * c2), jnp.float32),    # padded h2
            ],
        ),
        compiler_params=pltpu.CompilerParams(
            dimension_semantics=("parallel",)),
    )(x, w1, b1, w2, b2, w3, b3)

    # Single XLA fusion: parity depth-to-space + NHWC->NCHW + concat with skip.
    h3 = out.reshape(n, h, w, 2, 2, cout)                 # (n, i, j, py, px, c)
    h3 = jnp.transpose(h3, (0, 5, 1, 3, 2, 4)).reshape(n, cout, 2 * h, 2 * w)
    return jnp.concatenate([h3, skip_nchw.astype(jnp.float32)], axis=1)


# ---------------------------------------------------------------------------
# Pure-JAX reference (lax.conv_general_dilated) for correctness checking.
# ---------------------------------------------------------------------------
def reference_forward(params, x_nchw, skip_nchw):
    x = jnp.transpose(x_nchw, (0, 2, 3, 1)).astype(jnp.float32)

    def bn_relu(y, conv_b, bn):
        gamma, beta, mean, var = bn
        z = (y + conv_b - mean) / jnp.sqrt(var + _BN_EPS) * gamma + beta
        return jnp.maximum(z, 0.0)

    def conv(xn, w_oihw):
        w_hwio = jnp.transpose(w_oihw, (2, 3, 1, 0))
        return lax.conv_general_dilated(
            xn, w_hwio, (1, 1), [(1, 1), (1, 1)],
            dimension_numbers=("NHWC", "HWIO", "NHWC"))

    def convt(xn, w_iohw):
        w_hwio = jnp.transpose(w_iohw[:, :, ::-1, ::-1], (2, 3, 0, 1))
        return lax.conv_general_dilated(
            xn, w_hwio, (1, 1), [(1, 2), (1, 2)], lhs_dilation=(2, 2),
            dimension_numbers=("NHWC", "HWIO", "NHWC"))

    hid = bn_relu(conv(x, params["w1"]), params["b1"], params["bn1"])
    hid = bn_relu(conv(hid, params["w2"]), params["b2"], params["bn2"])
    hid = bn_relu(convt(hid, params["w3"]), params["b3"], params["bn3"])
    skip = jnp.transpose(skip_nchw, (0, 2, 3, 1)).astype(jnp.float32)
    cat = jnp.concatenate([hid, skip], axis=-1)
    return jnp.transpose(cat, (0, 3, 1, 2))


# ---------------------------------------------------------------------------
if __name__ == "__main__":
    key = jax.random.PRNGKey(0)
    in_ch, out_ch = 4, 4
    ch2 = out_ch * 2
    N, H, W = 2, 16, 16

    ks = jax.random.split(key, 20)

    def nrm(k, shape, s=0.1):
        return s * jax.random.normal(k, shape, jnp.float32)

    def bn_params(k0, k1, k2, k3, c):
        gamma = 1.0 + 0.1 * jax.random.normal(k0, (c,), jnp.float32)
        beta = nrm(k1, (c,))
        mean = nrm(k2, (c,))
        var = 0.5 + jnp.abs(jax.random.normal(k3, (c,), jnp.float32))
        return (gamma, beta, mean, var)

    params = {
        "w1": nrm(ks[0], (ch2, in_ch, 3, 3)),
        "b1": nrm(ks[1], (ch2,)),
        "bn1": bn_params(ks[2], ks[3], ks[4], ks[5], ch2),
        "w2": nrm(ks[6], (ch2, ch2, 3, 3)),
        "b2": nrm(ks[7], (ch2,)),
        "bn2": bn_params(ks[8], ks[9], ks[10], ks[11], ch2),
        "w3": nrm(ks[12], (ch2, out_ch, 3, 3)),   # ConvTranspose2d: (Cin, Cout, kH, kW)
        "b3": nrm(ks[13], (out_ch,)),
        "bn3": bn_params(ks[14], ks[15], ks[16], ks[17], out_ch),
    }

    x = jax.random.normal(ks[18], (N, in_ch, H, W), jnp.float32)
    skip = jax.random.normal(ks[19], (N, out_ch, 2 * H, 2 * W), jnp.float32)

    fwd = jax.jit(functools.partial(upsample_layer_forward, params))
    y = jax.block_until_ready(fwd(x, skip))

    assert y.shape == (N, 2 * out_ch, 2 * H, 2 * W), y.shape
    y_ref = reference_forward(params, x, skip)
    assert jnp.allclose(y, y_ref, atol=1e-3, rtol=1e-3), float(
        jnp.max(jnp.abs(y - y_ref)))

    print("KERNEL_OK")
</pallas_src>

<mosaic_0001>
module attributes {stable_mosaic.version = 11 : i64} {
  func.func @_fused_upsample_kernel(%arg0: i32, %arg1: memref<1x16x64xf32, #tpu.memory_space<vmem>>, %arg2: memref<3x72x128xf32, #tpu.memory_space<vmem>>, %arg3: memref<1x128xf32, #tpu.memory_space<vmem>>, %arg4: memref<3x144x128xf32, #tpu.memory_space<vmem>>, %arg5: memref<1x128xf32, #tpu.memory_space<vmem>>, %arg6: memref<2x136x256xf32, #tpu.memory_space<vmem>>, %arg7: memref<1x256xf32, #tpu.memory_space<vmem>>, %arg8: memref<1x16x256xf32, #tpu.memory_space<vmem>>, %arg9: memref<18x72xf32, #tpu.memory_space<vmem>>, %arg10: memref<18x144xf32, #tpu.memory_space<vmem>>, %arg11: memref<17x136xf32, #tpu.memory_space<vmem>>) attributes {dimension_semantics = [#tpu.dimension_semantics<parallel>], iteration_bounds = array<i64: 2>, scalar_prefetch = 0 : i64, scratch_operands = 3 : i64, tpu.core_type = #tpu.core_type<tc>, window_params = [{transform_indices = @transform_0, window_bounds = array<i64: 1, 16, 64>}, {pipeline_mode = #tpu.pipeline_mode<synchronous>, transform_indices = @transform_1, window_bounds = array<i64: 3, 72, 128>}, {pipeline_mode = #tpu.pipeline_mode<synchronous>, transform_indices = @transform_2, window_bounds = array<i64: 1, 128>}, {pipeline_mode = #tpu.pipeline_mode<synchronous>, transform_indices = @transform_3, window_bounds = array<i64: 3, 144, 128>}, {pipeline_mode = #tpu.pipeline_mode<synchronous>, transform_indices = @transform_4, window_bounds = array<i64: 1, 128>}, {pipeline_mode = #tpu.pipeline_mode<synchronous>, transform_indices = @transform_5, window_bounds = array<i64: 2, 136, 256>}, {pipeline_mode = #tpu.pipeline_mode<synchronous>, transform_indices = @transform_6, window_bounds = array<i64: 1, 256>}, {transform_indices = @transform_7, window_bounds = array<i64: 1, 16, 256>}]} {
    %cst = arith.constant 0.000000e+00 : f32
    %0 = vector.broadcast %cst : f32 to vector<1x72xf32>
    %c0 = arith.constant 0 : index
    %c0_0 = arith.constant 0 : index
    %1 = vector.load %arg9[%c0, %c0_0] : memref<18x72xf32, #tpu.memory_space<vmem>>, vector<1x72xf32>
    tpu.vector_store %arg9[%c0, %c0_0], %0 {strides = array<i32>} : memref<18x72xf32, #tpu.memory_space<vmem>>, vector<1x72xf32>,
    %cst_1 = arith.constant 0.000000e+00 : f32
    %2 = vector.broadcast %cst_1 : f32 to vector<1x72xf32>
    %c17 = arith.constant 17 : index
    %c0_2 = arith.constant 0 : index
    %3 = vector.load %arg9[%c17, %c0_2] : memref<18x72xf32, #tpu.memory_space<vmem>>, vector<1x72xf32>
    tpu.vector_store %arg9[%c17, %c0_2], %2 {strides = array<i32>} : memref<18x72xf32, #tpu.memory_space<vmem>>, vector<1x72xf32>,
    %cst_3 = arith.constant 0.000000e+00 : f32
    %4 = vector.broadcast %cst_3 : f32 to vector<18x4xf32>
    %c0_4 = arith.constant 0 : index
    %c0_5 = arith.constant 0 : index
    %5 = vector.load %arg9[%c0_4, %c0_5] : memref<18x72xf32, #tpu.memory_space<vmem>>, vector<18x4xf32>
    tpu.vector_store %arg9[%c0_4, %c0_5], %4 {strides = array<i32>} : memref<18x72xf32, #tpu.memory_space<vmem>>, vector<18x4xf32>,
    %cst_6 = arith.constant 0.000000e+00 : f32
    %6 = vector.broadcast %cst_6 : f32 to vector<18x4xf32>
    %c0_7 = arith.constant 0 : index
    %c68 = arith.constant 68 : index
    %7 = vector.load %arg9[%c0_7, %c68] : memref<18x72xf32, #tpu.memory_space<vmem>>, vector<18x4xf32>
    tpu.vector_store %arg9[%c0_7, %c68], %6 {strides = array<i32>} : memref<18x72xf32, #tpu.memory_space<vmem>>, vector<18x4xf32>,
    %c0_8 = arith.constant 0 : index
    %c0_9 = arith.constant 0 : index
    %c0_10 = arith.constant 0 : index
    %8 = vector.load %arg1[%c0_8, %c0_9, %c0_10] : memref<1x16x64xf32, #tpu.memory_space<vmem>>, vector<1x16x64xf32>
    %9 = vector.shape_cast %8 : vector<1x16x64xf32> to vector<16x64xf32>
    %c1 = arith.constant 1 : index
    %c4 = arith.constant 4 : index
    %10 = vector.load %arg9[%c1, %c4] : memref<18x72xf32, #tpu.memory_space<vmem>>, vector<16x64xf32>
    tpu.vector_store %arg9[%c1, %c4], %9 {strides = array<i32>} : memref<18x72xf32, #tpu.memory_space<vmem>>, vector<16x64xf32>,
    %c0_11 = arith.constant 0 : index
    %c0_12 = arith.constant 0 : index
    %11 = vector.load %arg9[%c0_11, %c0_12] : memref<18x72xf32, #tpu.memory_space<vmem>>, vector<16x72xf32>
    %c0_13 = arith.constant 0 : index
    %c0_14 = arith.constant 0 : index
    %c0_15 = arith.constant 0 : index
    %12 = vector.load %arg2[%c0_13, %c0_14, %c0_15] : memref<3x72x128xf32, #tpu.memory_space<vmem>>, vector<1x72x128xf32>
    %13 = vector.shape_cast %12 : vector<1x72x128xf32> to vector<72x128xf32>
    %cst_16 = arith.constant dense<0.000000e+00> : vector<16x128xf32>
    %14 = tpu.matmul %11, %13, %cst_16 {dimension_numbers = #tpu.dot_dimension_numbers<[1], [0], [0], [1], [0, 0, 1, 1], [], []>} : vector<16x72xf32>, vector<72x128xf32>, vector<16x128xf32> -> vector<16x128xf32>
    %c1_17 = arith.constant 1 : index
    %c0_18 = arith.constant 0 : index
    %15 = vector.load %arg9[%c1_17, %c0_18] : memref<18x72xf32, #tpu.memory_space<vmem>>, vector<16x72xf32>
    %c1_19 = arith.constant 1 : index
    %c0_20 = arith.constant 0 : index
    %c0_21 = arith.constant 0 : index
    %16 = vector.load %arg2[%c1_19, %c0_20, %c0_21] : memref<3x72x128xf32, #tpu.memory_space<vmem>>, vector<1x72x128xf32>
    %17 = vector.shape_cast %16 : vector<1x72x128xf32> to vector<72x128xf32>
    %cst_22 = arith.constant dense<0.000000e+00> : vector<16x128xf32>
    %18 = tpu.matmul %15, %17, %cst_22 {dimension_numbers = #tpu.dot_dimension_numbers<[1], [0], [0], [1], [0, 0, 1, 1], [], []>} : vector<16x72xf32>, vector<72x128xf32>, vector<16x128xf32> -> vector<16x128xf32>
    %19 = arith.addf %14, %18 : vector<16x128xf32>
    %c2 = arith.constant 2 : index
    %c0_23 = arith.constant 0 : index
    %20 = vector.load %arg9[%c2, %c0_23] : memref<18x72xf32, #tpu.memory_space<vmem>>, vector<16x72xf32>
    %c2_24 = arith.constant 2 : index
    %c0_25 = arith.constant 0 : index
    %c0_26 = arith.constant 0 : index
    %21 = vector.load %arg2[%c2_24, %c0_25, %c0_26] : memref<3x72x128xf32, #tpu.memory_space<vmem>>, vector<1x72x128xf32>
    %22 = vector.shape_cast %21 : vector<1x72x128xf32> to vector<72x128xf32>
    %cst_27 = arith.constant dense<0.000000e+00> : vector<16x128xf32>
    %23 = tpu.matmul %20, %22, %cst_27 {dimension_numbers = #tpu.dot_dimension_numbers<[1], [0], [0], [1], [0, 0, 1, 1], [], []>} : vector<16x72xf32>, vector<72x128xf32>, vector<16x128xf32> -> vector<16x128xf32>
    %24 = arith.addf %19, %23 : vector<16x128xf32>
    %c0_28 = arith.constant 0 : index
    %c0_29 = arith.constant 0 : index
    %25 = vector.load %arg3[%c0_28, %c0_29] : memref<1x128xf32, #tpu.memory_space<vmem>>, vector<1x128xf32>
    %26 = vector.broadcast %25 : vector<1x128xf32> to vector<16x128xf32>
    %27 = arith.addf %24, %26 : vector<16x128xf32>
    %cst_30 = arith.constant 0.000000e+00 : f32
    %28 = vector.broadcast %cst_30 : f32 to vector<16x128xf32>
    %29 = arith.maximumf %27, %28 : vector<16x128xf32>
    %cst_31 = arith.constant 0.000000e+00 : f32
    %30 = vector.broadcast %cst_31 : f32 to vector<1x144xf32>
    %c0_32 = arith.constant 0 : index
    %c0_33 = arith.constant 0 : index
    %31 = vector.load %arg10[%c0_32, %c0_33] : memref<18x144xf32, #tpu.memory_space<vmem>>, vector<1x144xf32>
    tpu.vector_store %arg10[%c0_32, %c0_33], %30 {strides = array<i32>} : memref<18x144xf32, #tpu.memory_space<vmem>>, vector<1x144xf32>,
    %cst_34 = arith.constant 0.000000e+00 : f32
    %32 = vector.broadcast %cst_34 : f32 to vector<1x144xf32>
    %c17_35 = arith.constant 17 : index
    %c0_36 = arith.constant 0 : index
    %33 = vector.load %arg10[%c17_35, %c0_36] : memref<18x144xf32, #tpu.memory_space<vmem>>, vector<1x144xf32>
    tpu.vector_store %arg10[%c17_35, %c0_36], %32 {strides = array<i32>} : memref<18x144xf32, #tpu.memory_space<vmem>>, vector<1x144xf32>,
    %cst_37 = arith.constant 0.000000e+00 : f32
    %34 = vector.broadcast %cst_37 : f32 to vector<18x8xf32>
    %c0_38 = arith.constant 0 : index
    %c0_39 = arith.constant 0 : index
    %35 = vector.load %arg10[%c0_38, %c0_39] : memref<18x144xf32, #tpu.memory_space<vmem>>, vector<18x8xf32>
    tpu.vector_store %arg10[%c0_38, %c0_39], %34 {strides = array<i32>} : memref<18x144xf32, #tpu.memory_space<vmem>>, vector<18x8xf32>,
    %cst_40 = arith.constant 0.000000e+00 : f32
    %36 = vector.broadcast %cst_40 : f32 to vector<18x8xf32>
    %c0_41 = arith.constant 0 : index
    %c136 = arith.constant 136 : index
    %37 = vector.load %arg10[%c0_41, %c136] : memref<18x144xf32, #tpu.memory_space<vmem>>, vector<18x8xf32>
    tpu.vector_store %arg10[%c0_41, %c136], %36 {strides = array<i32>} : memref<18x144xf32, #tpu.memory_space<vmem>>, vector<18x8xf32>,
    %c1_42 = arith.constant 1 : index
    %c8 = arith.constant 8 : index
    %38 = vector.load %arg10[%c1_42, %c8] : memref<18x144xf32, #tpu.memory_space<vmem>>, vector<16x128xf32>
    tpu.vector_store %arg10[%c1_42, %c8], %29 {strides = array<i32>} : memref<18x144xf32, #tpu.memory_space<vmem>>, vector<16x128xf32>,
    %c0_43 = arith.constant 0 : index
    %c0_44 = arith.constant 0 : index
    %39 = vector.load %arg10[%c0_43, %c0_44] : memref<18x144xf32, #tpu.memory_space<vmem>>, vector<16x144xf32>
    %c0_45 = arith.constant 0 : index
    %c0_46 = arith.constant 0 : index
    %c0_47 = arith.constant 0 : index
    %40 = vector.load %arg4[%c0_45, %c0_46, %c0_47] : memref<3x144x128xf32, #tpu.memory_space<vmem>>, vector<1x144x128xf32>
    %41 = vector.shape_cast %40 : vector<1x144x128xf32> to vector<144x128xf32>
    %cst_48 = arith.constant dense<0.000000e+00> : vector<16x128xf32>
    %42 = tpu.matmul %39, %41, %cst_48 {dimension_numbers = #tpu.dot_dimension_numbers<[1], [0], [0], [1], [0, 0, 1, 1], [], []>} : vector<16x144xf32>, vector<144x128xf32>, vector<16x128xf32> -> vector<16x128xf32>
    %c1_49 = arith.constant 1 : index
    %c0_50 = arith.constant 0 : index
    %43 = vector.load %arg10[%c1_49, %c0_50] : memref<18x144xf32, #tpu.memory_space<vmem>>, vector<16x144xf32>
    %c1_51 = arith.constant 1 : index
    %c0_52 = arith.constant 0 : index
    %c0_53 = arith.constant 0 : index
    %44 = vector.load %arg4[%c1_51, %c0_52, %c0_53] : memref<3x144x128xf32, #tpu.memory_space<vmem>>, vector<1x144x128xf32>
    %45 = vector.shape_cast %44 : vector<1x144x128xf32> to vector<144x128xf32>
    %cst_54 = arith.constant dense<0.000000e+00> : vector<16x128xf32>
    %46 = tpu.matmul %43, %45, %cst_54 {dimension_numbers = #tpu.dot_dimension_numbers<[1], [0], [0], [1], [0, 0, 1, 1], [], []>} : vector<16x144xf32>, vector<144x128xf32>, vector<16x128xf32> -> vector<16x128xf32>
    %47 = arith.addf %42, %46 : vector<16x128xf32>
    %c2_55 = arith.constant 2 : index
    %c0_56 = arith.constant 0 : index
    %48 = vector.load %arg10[%c2_55, %c0_56] : memref<18x144xf32, #tpu.memory_space<vmem>>, vector<16x144xf32>
    %c2_57 = arith.constant 2 : index
    %c0_58 = arith.constant 0 : index
    %c0_59 = arith.constant 0 : index
    %49 = vector.load %arg4[%c2_57, %c0_58, %c0_59] : memref<3x144x128xf32, #tpu.memory_space<vmem>>, vector<1x144x128xf32>
    %50 = vector.shape_cast %49 : vector<1x144x128xf32> to vector<144x128xf32>
    %cst_60 = arith.constant dense<0.000000e+00> : vector<16x128xf32>
    %51 = tpu.matmul %48, %50, %cst_60 {dimension_numbers = #tpu.dot_dimension_numbers<[1], [0], [0], [1], [0, 0, 1, 1], [], []>} : vector<16x144xf32>, vector<144x128xf32>, vector<16x128xf32> -> vector<16x128xf32>
    %52 = arith.addf %47, %51 : vector<16x128xf32>
    %c0_61 = arith.constant 0 : index
    %c0_62 = arith.constant 0 : index
    %53 = vector.load %arg5[%c0_61, %c0_62] : memref<1x128xf32, #tpu.memory_space<vmem>>, vector<1x128xf32>
    %54 = vector.broadcast %53 : vector<1x128xf32> to vector<16x128xf32>
    %55 = arith.addf %52, %54 : vector<16x128xf32>
    %cst_63 = arith.constant 0.000000e+00 : f32
    %56 = vector.broadcast %cst_63 : f32 to vector<16x128xf32>
    %57 = arith.maximumf %55, %56 : vector<16x128xf32>
    %cst_64 = arith.constant 0.000000e+00 : f32
    %58 = vector.broadcast %cst_64 : f32 to vector<1x136xf32>
    %c16 = arith.constant 16 : index
    %c0_65 = arith.constant 0 : index
    %59 = vector.load %arg11[%c16, %c0_65] : memref<17x136xf32, #tpu.memory_space<vmem>>, vector<1x136xf32>
    tpu.vector_store %arg11[%c16, %c0_65], %58 {strides = array<i32>} : memref<17x136xf32, #tpu.memory_space<vmem>>, vector<1x136xf32>,
    %cst_66 = arith.constant 0.000000e+00 : f32
    %60 = vector.broadcast %cst_66 : f32 to vector<17x8xf32>
    %c0_67 = arith.constant 0 : index
    %c128 = arith.constant 128 : index
    %61 = vector.load %arg11[%c0_67, %c128] : memref<17x136xf32, #tpu.memory_space<vmem>>, vector<17x8xf32>
    tpu.vector_store %arg11[%c0_67, %c128], %60 {strides = array<i32>} : memref<17x136xf32, #tpu.memory_space<vmem>>, vector<17x8xf32>,
    %c0_68 = arith.constant 0 : index
    %c0_69 = arith.constant 0 : index
    %62 = vector.load %arg11[%c0_68, %c0_69] : memref<17x136xf32, #tpu.memory_space<vmem>>, vector<16x128xf32>
    tpu.vector_store %arg11[%c0_68, %c0_69], %57 {strides = array<i32>} : memref<17x136xf32, #tpu.memory_space<vmem>>, vector<16x128xf32>,
    %c0_70 = arith.constant 0 : index
    %c0_71 = arith.constant 0 : index
    %63 = vector.load %arg11[%c0_70, %c0_71] : memref<17x136xf32, #tpu.memory_space<vmem>>, vector<16x136xf32>
    %c0_72 = arith.constant 0 : index
    %c0_73 = arith.constant 0 : index
    %c0_74 = arith.constant 0 : index
    %64 = vector.load %arg6[%c0_72, %c0_73, %c0_74] : memref<2x136x256xf32, #tpu.memory_space<vmem>>, vector<1x136x256xf32>
    %65 = vector.shape_cast %64 : vector<1x136x256xf32> to vector<136x256xf32>
    %cst_75 = arith.constant dense<0.000000e+00> : vector<16x256xf32>
    %66 = tpu.matmul %63, %65, %cst_75 {dimension_numbers = #tpu.dot_dimension_numbers<[1], [0], [0], [1], [0, 0, 1, 1], [], []>} : vector<16x136xf32>, vector<136x256xf32>, vector<16x256xf32> -> vector<16x256xf32>
    %c1_76 = arith.constant 1 : index
    %c0_77 = arith.constant 0 : index
    %67 = vector.load %arg11[%c1_76, %c0_77] : memref<17x136xf32, #tpu.memory_space<vmem>>, vector<16x136xf32>
    %c1_78 = arith.constant 1 : index
    %c0_79 = arith.constant 0 : index
    %c0_80 = arith.constant 0 : index
    %68 = vector.load %arg6[%c1_78, %c0_79, %c0_80] : memref<2x136x256xf32, #tpu.memory_space<vmem>>, vector<1x136x256xf32>
    %69 = vector.shape_cast %68 : vector<1x136x256xf32> to vector<136x256xf32>
    %cst_81 = arith.constant dense<0.000000e+00> : vector<16x256xf32>
    %70 = tpu.matmul %67, %69, %cst_81 {dimension_numbers = #tpu.dot_dimension_numbers<[1], [0], [0], [1], [0, 0, 1, 1], [], []>} : vector<16x136xf32>, vector<136x256xf32>, vector<16x256xf32> -> vector<16x256xf32>
    %71 = arith.addf %66, %70 : vector<16x256xf32>
    %c0_82 = arith.constant 0 : index
    %c0_83 = arith.constant 0 : index
    %72 = vector.load %arg7[%c0_82, %c0_83] : memref<1x256xf32, #tpu.memory_space<vmem>>, vector<1x256xf32>
    %73 = vector.broadcast %72 : vector<1x256xf32> to vector<16x256xf32>
    %74 = arith.addf %71, %73 : vector<16x256xf32>
    %cst_84 = arith.constant 0.000000e+00 : f32
    %75 = vector.broadcast %cst_84 : f32 to vector<16x256xf32>
    %76 = arith.maximumf %74, %75 : vector<16x256xf32>
    %c0_85 = arith.constant 0 : index
    %c0_86 = arith.constant 0 : index
    %c0_87 = arith.constant 0 : index
    %77 = vector.load %arg8[%c0_85, %c0_86, %c0_87] : memref<1x16x256xf32, #tpu.memory_space<vmem>>, vector<1x16x256xf32>
    %78 = vector.shape_cast %77 : vector<1x16x256xf32> to vector<16x256xf32>
    %79 = vector.shape_cast %76 : vector<16x256xf32> to vector<1x16x256xf32>
    tpu.vector_store %arg8[%c0_85, %c0_86, %c0_87], %79 {strides = array<i32>} : memref<1x16x256xf32, #tpu.memory_space<vmem>>, vector<1x16x256xf32>,
    return
  }
  func.func @transform_0(%arg0: i32) -> (i32, i32, i32) {
    %c0_i32 = arith.constant 0 : i32
    %c0_i32_0 = arith.constant 0 : i32
    %c0_i32_1 = arith.constant 0 : i32
    return %arg0, %c0_i32, %c0_i32_0 : i32, i32, i32
  }
  func.func @transform_1(%arg0: i32) -> (i32, i32, i32) {
    %c0_i32 = arith.constant 0 : i32
    %c0_i32_0 = arith.constant 0 : i32
    %c0_i32_1 = arith.constant 0 : i32
    %c0_i32_2 = arith.constant 0 : i32
    return %c0_i32, %c0_i32_0, %c0_i32_1 : i32, i32, i32
  }
  func.func @transform_2(%arg0: i32) -> (i32, i32) {
    %c0_i32 = arith.constant 0 : i32
    %c0_i32_0 = arith.constant 0 : i32
    %c0_i32_1 = arith.constant 0 : i32
    return %c0_i32, %c0_i32_0 : i32, i32
  }
  func.func @transform_3(%arg0: i32) -> (i32, i32, i32) {
    %c0_i32 = arith.constant 0 : i32
    %c0_i32_0 = arith.constant 0 : i32
    %c0_i32_1 = arith.constant 0 : i32
    %c0_i32_2 = arith.constant 0 : i32
    return %c0_i32, %c0_i32_0, %c0_i32_1 : i32, i32, i32
  }
  func.func @transform_4(%arg0: i32) -> (i32, i32) {
    %c0_i32 = arith.constant 0 : i32
    %c0_i32_0 = arith.constant 0 : i32
    %c0_i32_1 = arith.constant 0 : i32
    return %c0_i32, %c0_i32_0 : i32, i32
  }
  func.func @transform_5(%arg0: i32) -> (i32, i32, i32) {
    %c0_i32 = arith.constant 0 : i32
    %c0_i32_0 = arith.constant 0 : i32
    %c0_i32_1 = arith.constant 0 : i32
    %c0_i32_2 = arith.constant 0 : i32
    return %c0_i32, %c0_i32_0, %c0_i32_1 : i32, i32, i32
  }
  func.func @transform_6(%arg0: i32) -> (i32, i32) {
    %c0_i32 = arith.constant 0 : i32
    %c0_i32_0 = arith.constant 0 : i32
    %c0_i32_1 = arith.constant 0 : i32
    return %c0_i32, %c0_i32_0 : i32, i32
  }
  func.func @transform_7(%arg0: i32) -> (i32, i32, i32) {
    %c0_i32 = arith.constant 0 : i32
    %c0_i32_0 = arith.constant 0 : i32
    %c0_i32_1 = arith.constant 0 : i32
    return %arg0, %c0_i32, %c0_i32_0 : i32, i32, i32
  }
}

</mosaic_0001>

<llo_original>
// kernel: tile.22
$region0: #{tile.22}
  #allocation0 [shape = 's32[1]{0}', space=sflag, size = 0x4, scoped, tag = 'scoped memory for tile.22']
  %s0 = inlined_call_operand.vmem [shape: f32[4], index: 0, kind: input, shape index: {}]
  %s1 = inlined_call_operand.vmem [shape: f32[64,4], index: 1, kind: output, shape index: {}]
  // Predicated region
  $region2: #{tile.22} parent=0 // pred_check
    _
  $region3: #{tile.22} parent=0 // pred_check_branch
    %3 = sbr.rel (0) target = $region5
  $region4: #{tile.22} parent=0 // pred_region
    _
  $region5: #{tile.22} parent=0 // pred_fallthru
    _
  %v4 = vld [vmem:[%s0] ss:$0 sm:$0xff]
  %5 = vst [vmem:[%s1] sm:$0xff] %v4
  %s6 = scalar_lea.vmem %s1, 8
  %7 = vst [vmem:[%s6] sm:$0xff] %v4
  %s8 = scalar_lea.vmem %s1, 16
  %9 = vst [vmem:[%s8] sm:$0xff] %v4
  %s10 = scalar_lea.vmem %s1, 24
  %11 = vst [vmem:[%s10] sm:$0xff] %v4
  %s12 = scalar_lea.vmem %s1, 32
  %13 = vst [vmem:[%s12] sm:$0xff] %v4
  %s14 = scalar_lea.vmem %s1, 40
  %15 = vst [vmem:[%s14] sm:$0xff] %v4
  %s16 = scalar_lea.vmem %s1, 48
  %17 = vst [vmem:[%s16] sm:$0xff] %v4
  %s18 = scalar_lea.vmem %s1, 56
  %19 = vst [vmem:[%s18] sm:$0xff] %v4

// kernel: tile.23
$region0: #{tile.23}
  %s0 = inlined_call_operand.vmem [shape: f32[64,4], index: 0, kind: input, shape index: {}]
  %s1 = inlined_call_operand.vmem [shape: f32[1,256], index: 1, kind: output, shape index: {}]
  $region1: #{tile.23} parent=0
    #allocation0 [shape = 'u8[8192]{0}', space=vmem, size = 0x2000, scoped, tag = 'scoped mem for output reshape']
    %v2 = vld [vmem:[%s0] sm:$0x1]
    %s3 = scalar_lea.vmem %s0, 31
    %v4 = vld [vmem:[%s3] sm:$0x2]
    %vm5 = vcmask 1041409
    %v6 = vsel %vm5, %v4, %v2
    %vm7 = vcmask 31744
    %8 = vst.msk [vmem:[#allocation0] ss:$8 sm:$0x3] %vm7, %v6
    %s9 = scalar_lea.vmem %s0, 31
    %v10 = vld [vmem:[%s9] sm:$0x1]
    %s11 = scalar_lea.vmem %s0, 62
    %v12 = vld [vmem:[%s11] sm:$0x2]
    %vm13 = vcmask 1041409
    %v14 = vsel %vm13, %v12, %v10
    %15 = vrot.lane.b32.xlu0 %v14, 124
    %v16 = vpop.permute.xlu0 %15
    %vm17 = vcmask 1048544
    %18 = vst.msk [vmem:[#allocation0] ss:$8 sm:$0x3] %vm17, %v16
    %s19 = scalar_lea.vmem %s0, 30
    %v20 = vld [vmem:[%s19] sm:$0x1]
    %s21 = scalar_lea.vmem %s0, 61
    %v22 = vld [vmem:[%s21] sm:$0x2]
    %vm23 = vcmask 1041409
    %v24 = vsel %vm23, %v22, %v20
    %25 = vrot.lane.b32.xlu0 %v24, 120
    %v26 = vpop.permute.xlu0 %25
    %vm27 = vcmask 1015744
    %28 = vst.msk [vmem:[#allocation0] ss:$8 sm:$0x3] %vm27, %v26
    %s29 = scalar_lea.vmem %s0, 29
    %v30 = vld [vmem:[%s29] sm:$0x1]
    %s31 = scalar_lea.vmem %s0, 60
    %v32 = vld [vmem:[%s31] sm:$0x2]
    %vm33 = vcmask 1041409
    %v34 = vsel %vm33, %v32, %v30
    %35 = vrot.lane.b32.xlu0 %v34, 116
    %v36 = vpop.permute.xlu0 %35
    %vm37 = vcmask 982944
    %38 = vst.msk [vmem:[#allocation0] ss:$8 sm:$0x3] %vm37, %v36
    %s39 = scalar_lea.vmem %s0, 28
    %v40 = vld [vmem:[%s39] sm:$0x1]
    %s41 = scalar_lea.vmem %s0, 59
    %v42 = vld [vmem:[%s41] sm:$0x2]
    %vm43 = vcmask 1041409
    %v44 = vsel %vm43, %v42, %v40
    %45 = vrot.lane.b32.xlu0 %v44, 112
    %v46 = vpop.permute.xlu0 %45
    %vm47 = vcmask 950144
    %48 = vst.msk [vmem:[#allocation0] ss:$8 sm:$0x3] %vm47, %v46
    %s49 = scalar_lea.vmem %s0, 27
    %v50 = vld [vmem:[%s49] sm:$0x1]
    %s51 = scalar_lea.vmem %s0, 58
    %v52 = vld [vmem:[%s51] sm:$0x2]
    %vm53 = vcmask 1041409
    %v54 = vsel %vm53, %v52, %v50
    %55 = vrot.lane.b32.xlu0 %v54, 108
    %v56 = vpop.permute.xlu0 %55
    %vm57 = vcmask 917344
    %58 = vst.msk [vmem:[#allocation0] ss:$8 sm:$0x3] %vm57, %v56
    %s59 = scalar_lea.vmem %s0, 26
    %v60 = vld [vmem:[%s59] sm:$0x1]
    %s61 = scalar_lea.vmem %s0, 57
    %v62 = vld [vmem:[%s61] sm:$0x2]
    %vm63 = vcmask 1041409
    %v64 = vsel %vm63, %v62, %v60
    %65 = vrot.lane.b32.xlu0 %v64, 104
    %v66 = vpop.permute.xlu0 %65
    %vm67 = vcmask 884544
    %68 = vst.msk [vmem:[#allocation0] ss:$8 sm:$0x3] %vm67, %v66
    %s69 = scalar_lea.vmem %s0, 25
    %v70 = vld [vmem:[%s69] sm:$0x1]
    %s71 = scalar_lea.vmem %s0, 56
    %v72 = vld [vmem:[%s71] sm:$0x2]
    %vm73 = vcmask 1041409
    %v74 = vsel %vm73, %v72, %v70
    %75 = vrot.lane.b32.xlu0 %v74, 100
    %v76 = vpop.permute.xlu0 %75
    %vm77 = vcmask 851744
    %78 = vst.msk [vmem:[#allocation0] ss:$8 sm:$0x3] %vm77, %v76
    %s79 = scalar_lea.vmem %s0, 24
    %v80 = vld [vmem:[%s79] sm:$0x1]
    %s81 = scalar_lea.vmem %s0, 55
    %v82 = vld [vmem:[%s81] sm:$0x2]
    %vm83 = vcmask 1041409
    %v84 = vsel %vm83, %v82, %v80
    %85 = vrot.lane.b32.xlu0 %v84, 96
    %v86 = vpop.permute.xlu0 %85
    %vm87 = vcmask 818944
    %88 = vst.msk [vmem:[#allocation0] ss:$8 sm:$0x3] %vm87, %v86
    %s89 = scalar_lea.vmem %s0, 23
    %v90 = vld [vmem:[%s89] sm:$0x1]
    %s91 = scalar_lea.vmem %s0, 54
    %v92 = vld [vmem:[%s91] sm:$0x2]
    %vm93 = vcmask 1041409
    %v94 = vsel %vm93, %v92, %v90
    %95 = vrot.lane.b32.xlu0 %v94, 92
    %v96 = vpop.permute.xlu0 %95
    %vm97 = vcmask 786144
    %98 = vst.msk [vmem:[#allocation0] ss:$8 sm:$0x3] %vm97, %v96
    %s99 = scalar_lea.vmem %s0, 22
    %v100 = vld [vmem:[%s99] sm:$0x1]
    %s101 = scalar_lea.vmem %s0, 53
    %v102 = vld [vmem:[%s101] sm:$0x2]
    %vm103 = vcmask 1041409
    %v104 = vsel %vm103, %v102, %v100
    %105 = vrot.lane.b32.xlu0 %v104, 88
    %v106 = vpop.permute.xlu0 %105
    %vm107 = vcmask 753344
    %108 = vst.msk [vmem:[#allocation0] ss:$8 sm:$0x3] %vm107, %v106
    %s109 = scalar_lea.vmem %s0, 21
    %v110 = vld [vmem:[%s109] sm:$0x1]
    %s111 = scalar_lea.vmem %s0, 52
    %v112 = vld [vmem:[%s111] sm:$0x2]
    %vm113 = vcmask 1041409
    %v114 = vsel %vm113, %v112, %v110
    %115 = vrot.lane.b32.xlu0 %v114, 84
    %v116 = vpop.permute.xlu0 %115
    %vm117 = vcmask 720544
    %118 = vst.msk [vmem:[#allocation0] ss:$8 sm:$0x3] %vm117, %v116
    %s119 = scalar_lea.vmem %s0, 20
    %v120 = vld [vmem:[%s119] sm:$0x1]
    %s121 = scalar_lea.vmem %s0, 51
    %v122 = vld [vmem:[%s121] sm:$0x2]
    %vm123 = vcmask 1041409
    %v124 = vsel %vm123, %v122, %v120
    %125 = vrot.lane.b32.xlu0 %v124, 80
    %v126 = vpop.permute.xlu0 %125
    %vm127 = vcmask 687744
    %128 = vst.msk [vmem:[#allocation0] ss:$8 sm:$0x3] %vm127, %v126
    %s129 = scalar_lea.vmem %s0, 19
    %v130 = vld [vmem:[%s129] sm:$0x1]
    %s131 = scalar_lea.vmem %s0, 50
    %v132 = vld [vmem:[%s131] sm:$0x2]
    %vm133 = vcmask 1041409
    %v134 = vsel %vm133, %v132, %v130
    %135 = vrot.lane.b32.xlu0 %v134, 76
    %v136 = vpop.permute.xlu0 %135
    %vm137 = vcmask 654944
    %138 = vst.msk [vmem:[#allocation0] ss:$8 sm:$0x3] %vm137, %v136
    %s139 = scalar_lea.vmem %s0, 18
    %v140 = vld [vmem:[%s139] sm:$0x1]
    %s141 = scalar_lea.vmem %s0, 49
    %v142 = vld [vmem:[%s141] sm:$0x2]
    %vm143 = vcmask 1041409
    %v144 = vsel %vm143, %v142, %v140
    %145 = vrot.lane.b32.xlu0 %v144, 72
    %v146 = vpop.permute.xlu0 %145
    %vm147 = vcmask 622144
    %148 = vst.msk [vmem:[#allocation0] ss:$8 sm:$0x3] %vm147, %v146
    %s149 = scalar_lea.vmem %s0, 17
    %v150 = vld [vmem:[%s149] sm:$0x1]
    %s151 = scalar_lea.vmem %s0, 48
    %v152 = vld [vmem:[%s151] sm:$0x2]
    %vm153 = vcmask 1041409
    %v154 = vsel %vm153, %v152, %v150
    %155 = vrot.lane.b32.xlu0 %v154, 68
    %v156 = vpop.permute.xlu0 %155
    %vm157 = vcmask 589344
    %158 = vst.msk [vmem:[#allocation0] ss:$8 sm:$0x3] %vm157, %v156
    %s159 = scalar_lea.vmem %s0, 16
    %v160 = vld [vmem:[%s159] sm:$0x1]
    %s161 = scalar_lea.vmem %s0, 47
    %v162 = vld [vmem:[%s161] sm:$0x2]
    %vm163 = vcmask 1041409
    %v164 = vsel %vm163, %v162, %v160
    %165 = vrot.lane.b32.xlu0 %v164, 64
    %v166 = vpop.permute.xlu0 %165
    %vm167 = vcmask 556544
    %168 = vst.msk [vmem:[#allocation0] ss:$8 sm:$0x3] %vm167, %v166
    %s169 = scalar_lea.vmem %s0, 15
    %v170 = vld [vmem:[%s169] sm:$0x1]
    %s171 = scalar_lea.vmem %s0, 46
    %v172 = vld [vmem:[%s171] sm:$0x2]
    %vm173 = vcmask 1041409
    %v174 = vsel %vm173, %v172, %v170
    %175 = vrot.lane.b32.xlu0 %v174, 60
    %v176 = vpop.permute.xlu0 %175
    %vm177 = vcmask 523744
    %178 = vst.msk [vmem:[#allocation0] ss:$8 sm:$0x3] %vm177, %v176
    %s179 = scalar_lea.vmem %s0, 14
    %v180 = vld [vmem:[%s179] sm:$0x1]
    %s181 = scalar_lea.vmem %s0, 45
    %v182 = vld [vmem:[%s181] sm:$0x2]
    %vm183 = vcmask 1041409
    %v184 = vsel %vm183, %v182, %v180
    %185 = vrot.lane.b32.xlu0 %v184, 56
    %v186 = vpop.permute.xlu0 %185
    %vm187 = vcmask 490944
    %188 = vst.msk [vmem:[#allocation0] ss:$8 sm:$0x3] %vm187, %v186
    %s189 = scalar_lea.vmem %s0, 13
    %v190 = vld [vmem:[%s189] sm:$0x1]
    %s191 = scalar_lea.vmem %s0, 44
    %v192 = vld [vmem:[%s191] sm:$0x2]
    %vm193 = vcmask 1041409
    %v194 = vsel %vm193, %v192, %v190
    %195 = vrot.lane.b32.xlu0 %v194, 52
    %v196 = vpop.permute.xlu0 %195
    %vm197 = vcmask 458144
    %198 = vst.msk [vmem:[#allocation0] ss:$8 sm:$0x3] %vm197, %v196
    %s199 = scalar_lea.vmem %s0, 12
    %v200 = vld [vmem:[%s199] sm:$0x1]
    %s201 = scalar_lea.vmem %s0, 43
    %v202 = vld [vmem:[%s201] sm:$0x2]
    %vm203 = vcmask 1041409
    %v204 = vsel %vm203, %v202, %v200
    %205 = vrot.lane.b32.xlu0 %v204, 48
    %v206 = vpop.permute.xlu0 %205
    %vm207 = vcmask 425344
    %208 = vst.msk [vmem:[#allocation0] ss:$8 sm:$0x3] %vm207, %v206
    %s209 = scalar_lea.vmem %s0, 11
    %v210 = vld [vmem:[%s209] sm:$0x1]
    %s211 = scalar_lea.vmem %s0, 42
    %v212 = vld [vmem:[%s211] sm:$0x2]
    %vm213 = vcmask 1041409
    %v214 = vsel %vm213, %v212, %v210
    %215 = vrot.lane.b32.xlu0 %v214, 44
    %v216 = vpop.permute.xlu0 %215
    %vm217 = vcmask 392544
    %218 = vst.msk [vmem:[#allocation0] ss:$8 sm:$0x3] %vm217, %v216
    %s219 = scalar_lea.vmem %s0, 10
    %v220 = vld [vmem:[%s219] sm:$0x1]
    %s221 = scalar_lea.vmem %s0, 41
    %v222 = vld [vmem:[%s221] sm:$0x2]
    %vm223 = vcmask 1041409
    %v224 = vsel %vm223, %v222, %v220
    %225 = vrot.lane.b32.xlu0 %v224, 40
    %v226 = vpop.permute.xlu0 %225
    %vm227 = vcmask 359744
    %228 = vst.msk [vmem:[#allocation0] ss:$8 sm:$0x3] %vm227, %v226
    %s229 = scalar_lea.vmem %s0, 9
    %v230 = vld [vmem:[%s229] sm:$0x1]
    %s231 = scalar_lea.vmem %s0, 40
    %v232 = vld [vmem:[%s231] sm:$0x2]
    %vm233 = vcmask 1041409
    %v234 = vsel %vm233, %v232, %v230
    %235 = vrot.lane.b32.xlu0 %v234, 36
    %v236 = vpop.permute.xlu0 %235
    %vm237 = vcmask 326944
    %238 = vst.msk [vmem:[#allocation0] ss:$8 sm:$0x3] %vm237, %v236
    %s239 = scalar_lea.vmem %s0, 8
    %v240 = vld [vmem:[%s239] sm:$0x1]
    %s241 = scalar_lea.vmem %s0, 39
    %v242 = vld [vmem:[%s241] sm:$0x2]
    %vm243 = vcmask 1041409
    %v244 = vsel %vm243, %v242, %v240
    %245 = vrot.lane.b32.xlu0 %v244, 32
    %v246 = vpop.permute.xlu0 %245
    %vm247 = vcmask 294144
    %248 = vst.msk [vmem:[#allocation0] ss:$8 sm:$0x3] %vm247, %v246
    %s249 = scalar_lea.vmem %s0, 7
    %v250 = vld [vmem:[%s249] sm:$0x1]
    %s251 = scalar_lea.vmem %s0, 38
    %v252 = vld [vmem:[%s251] sm:$0x2]
    %vm253 = vcmask 1041409
    %v254 = vsel %vm253, %v252, %v250
    %255 = vrot.lane.b32.xlu0 %v254, 28
    %v256 = vpop.permute.xlu0 %255
    %vm257 = vcmask 261344
    %258 = vst.msk [vmem:[#allocation0] ss:$8 sm:$0x3] %vm257, %v256
    %s259 = scalar_lea.vmem %s0, 6
    %v260 = vld [vmem:[%s259] sm:$0x1]
    %s261 = scalar_lea.vmem %s0, 37
    %v262 = vld [vmem:[%s261] sm:$0x2]
    %vm263 = vcmask 1041409
    %v264 = vsel %vm263, %v262, %v260
    %265 = vrot.lane.b32.xlu0 %v264, 24
    %v266 = vpop.permute.xlu0 %265
    %vm267 = vcmask 228544
    %268 = vst.msk [vmem:[#allocation0] ss:$8 sm:$0x3] %vm267, %v266
    %s269 = scalar_lea.vmem %s0, 5
    %v270 = vld [vmem:[%s269] sm:$0x1]
    %s271 = scalar_lea.vmem %s0, 36
    %v272 = vld [vmem:[%s271] sm:$0x2]
    %vm273 = vcmask 1041409
    %v274 = vsel %vm273, %v272, %v270
    %275 = vrot.lane.b32.xlu0 %v274, 20
    %v276 = vpop.permute.xlu0 %275
    %vm277 = vcmask 195744
    %278 = vst.msk [vmem:[#allocation0] ss:$8 sm:$0x3] %vm277, %v276
    %s279 = scalar_lea.vmem %s0, 4
    %v280 = vld [vmem:[%s279] sm:$0x1]
    %s281 = scalar_lea.vmem %s0, 35
    %v282 = vld [vmem:[%s281] sm:$0x2]
    %vm283 = vcmask 1041409
    %v284 = vsel %vm283, %v282, %v280
    %285 = vrot.lane.b32.xlu0 %v284, 16
    %v286 = vpop.permute.xlu0 %285
    %vm287 = vcmask 162944
    %288 = vst.msk [vmem:[#allocation0] ss:$8 sm:$0x3] %vm287, %v286
    %s289 = scalar_lea.vmem %s0, 3
    %v290 = vld [vmem:[%s289] sm:$0x1]
    %s291 = scalar_lea.vmem %s0, 34
    %v292 = vld [vmem:[%s291] sm:$0x2]
    %vm293 = vcmask 1041409
    %v294 = vsel %vm293, %v292, %v290
    %295 = vrot.lane.b32.xlu0 %v294, 12
    %v296 = vpop.permute.xlu0 %295
    %vm297 = vcmask 130144
    %298 = vst.msk [vmem:[#allocation0] ss:$8 sm:$0x3] %vm297, %v296
    %s299 = scalar_lea.vmem %s0, 2
    %v300 = vld [vmem:[%s299] sm:$0x1]
    %s301 = scalar_lea.vmem %s0, 33
    %v302 = vld [vmem:[%s301] sm:$0x2]
    %vm303 = vcmask 1041409
    %v304 = vsel %vm303, %v302, %v300
    %305 = vrot.lane.b32.xlu0 %v304, 8
    %v306 = vpop.permute.xlu0 %305
    %vm307 = vcmask 97344
    %308 = vst.msk [vmem:[#allocation0] ss:$8 sm:$0x3] %vm307, %v306
    %s309 = scalar_lea.vmem %s0, 1
    %v310 = vld [vmem:[%s309] sm:$0x1]
    %s311 = scalar_lea.vmem %s0, 32
    %v312 = vld [vmem:[%s311] sm:$0x2]
    %vm313 = vcmask 1041409
    %v314 = vsel %vm313, %v312, %v310
    %315 = vrot.lane.b32.xlu0 %v314, 4
    %v316 = vpop.permute.xlu0 %315
    %vm317 = vcmask 64544
    %318 = vst.msk [vmem:[#allocation0] ss:$8 sm:$0x3] %vm317, %v316
    %s320 = sshll.u32 1, 1
    %s321 = ssub.s32 %s320, 1
    %v323 = vld [vmem:[#allocation0] sm:%s321]
    %s324 = sshll.u32 1, 1
    %s325 = ssub.s32 %s324, 1
    %326 = vst [vmem:[%s1] sm:%s325] %v323
    %s327 = scalar_lea.vmem [#allocation0], 8
    %v328 = vld [vmem:[%s327] sm:%s321]
    %s329 = sshll.u32 1, 1
    %s330 = ssub.s32 %s329, 1
    %s331 = scalar_lea.vmem %s1, 1
    %332 = vst [vmem:[%s331] sm:%s330] %v328

// kernel: tile.14
$region0: #{tile.14}
  #allocation0 [shape = 's32[1]{0}', space=sflag, size = 0x4, scoped, tag = 'scoped memory for tile.14']
  %s0 = inlined_call_operand.vmem [shape: f32[8], index: 0, kind: input, shape index: {}]
  %s1 = inlined_call_operand.vmem [shape: f32[16,8], index: 1, kind: output, shape index: {}]
  // Predicated region
  $region2: #{tile.14} parent=0 // pred_check
    _
  $region3: #{tile.14} parent=0 // pred_check_branch
    %3 = sbr.rel (0) target = $region5
  $region4: #{tile.14} parent=0 // pred_region
    _
  $region5: #{tile.14} parent=0 // pred_fallthru
    _
  %v4 = vld [vmem:[%s0] ss:$0 sm:$0xff]
  %5 = vst [vmem:[%s1] sm:$0xff] %v4
  %s6 = scalar_lea.vmem %s1, 8
  %7 = vst [vmem:[%s6] sm:$0xff] %v4

// kernel: tile.15
$region0: #{tile.15}
  %s0 = inlined_call_operand.vmem [shape: f32[16,8], index: 0, kind: input, shape index: {}]
  %s1 = inlined_call_operand.vmem [shape: f32[1,128], index: 1, kind: output, shape index: {}]
  $region1: #{tile.15} parent=0
    #allocation0 [shape = 'u8[4096]{0}', space=vmem, size = 0x1000, scoped, tag = 'scoped mem for output reshape']
    %v2 = vld [vmem:[%s0] sm:$0x1]
    %vm3 = vcmask 64512
    %4 = vst.msk [vmem:[#allocation0] sm:$0x1] %vm3, %v2
    %s5 = scalar_lea.vmem %s0, 15
    %v6 = vld [vmem:[%s5] sm:$0x1]
    %7 = vrot.lane.b32.xlu0 %v6, 120
    %v8 = vpop.permute.xlu0 %7
    %vm9 = vcmask 1048512
    %10 = vst.msk [vmem:[#allocation0] sm:$0x1] %vm9, %v8
    %s11 = scalar_lea.vmem %s0, 14
    %v12 = vld [vmem:[%s11] sm:$0x1]
    %13 = vrot.lane.b32.xlu0 %v12, 112
    %v14 = vpop.permute.xlu0 %13
    %vm15 = vcmask 982912
    %16 = vst.msk [vmem:[#allocation0] sm:$0x1] %vm15, %v14
    %s17 = scalar_lea.vmem %s0, 13
    %v18 = vld [vmem:[%s17] sm:$0x1]
    %19 = vrot.lane.b32.xlu0 %v18, 104
    %v20 = vpop.permute.xlu0 %19
    %vm21 = vcmask 917312
    %22 = vst.msk [vmem:[#allocation0] sm:$0x1] %vm21, %v20
    %s23 = scalar_lea.vmem %s0, 12
    %v24 = vld [vmem:[%s23] sm:$0x1]
    %25 = vrot.lane.b32.xlu0 %v24, 96
    %v26 = vpop.permute.xlu0 %25
    %vm27 = vcmask 851712
    %28 = vst.msk [vmem:[#allocation0] sm:$0x1] %vm27, %v26
    %s29 = scalar_lea.vmem %s0, 11
    %v30 = vld [vmem:[%s29] sm:$0x1]
    %31 = vrot.lane.b32.xlu0 %v30, 88
    %v32 = vpop.permute.xlu0 %31
    %vm33 = vcmask 786112
    %34 = vst.msk [vmem:[#allocation0] sm:$0x1] %vm33, %v32
    %s35 = scalar_lea.vmem %s0, 10
    %v36 = vld [vmem:[%s35] sm:$0x1]
    %37 = vrot.lane.b32.xlu0 %v36, 80
    %v38 = vpop.permute.xlu0 %37
    %vm39 = vcmask 720512
    %40 = vst.msk [vmem:[#allocation0] sm:$0x1] %vm39, %v38
    %s41 = scalar_lea.vmem %s0, 9
    %v42 = vld [vmem:[%s41] sm:$0x1]
    %43 = vrot.lane.b32.xlu0 %v42, 72
    %v44 = vpop.permute.xlu0 %43
    %vm45 = vcmask 654912
    %46 = vst.msk [vmem:[#allocation0] sm:$0x1] %vm45, %v44
    %s47 = scalar_lea.vmem %s0, 8
    %v48 = vld [vmem:[%s47] sm:$0x1]
    %49 = vrot.lane.b32.xlu0 %v48, 64
    %v50 = vpop.permute.xlu0 %49
    %vm51 = vcmask 589312
    %52 = vst.msk [vmem:[#allocation0] sm:$0x1] %vm51, %v50
    %s53 = scalar_lea.vmem %s0, 7
    %v54 = vld [vmem:[%s53] sm:$0x1]
    %55 = vrot.lane.b32.xlu0 %v54, 56
    %v56 = vpop.permute.xlu0 %55
    %vm57 = vcmask 523712
    %58 = vst.msk [vmem:[#allocation0] sm:$0x1] %vm57, %v56
    %s59 = scalar_lea.vmem %s0, 6
    %v60 = vld [vmem:[%s59] sm:$0x1]
    %61 = vrot.lane.b32.xlu0 %v60, 48
    %v62 = vpop.permute.xlu0 %61
    %vm63 = vcmask 458112
    %64 = vst.msk [vmem:[#allocation0] sm:$0x1] %vm63, %v62
    %s65 = scalar_lea.vmem %s0, 5
    %v66 = vld [vmem:[%s65] sm:$0x1]
    %67 = vrot.lane.b32.xlu0 %v66, 40
    %v68 = vpop.permute.xlu0 %67
    %vm69 = vcmask 392512
    %70 = vst.msk [vmem:[#allocation0] sm:$0x1] %vm69, %v68
    %s71 = scalar_lea.vmem %s0, 4
    %v72 = vld [vmem:[%s71] sm:$0x1]
    %73 = vrot.lane.b32.xlu0 %v72, 32
    %v74 = vpop.permute.xlu0 %73
    %vm75 = vcmask 326912
    %76 = vst.msk [vmem:[#allocation0] sm:$0x1] %vm75, %v74
    %s77 = scalar_lea.vmem %s0, 3
    %v78 = vld [vmem:[%s77] sm:$0x1]
    %79 = vrot.lane.b32.xlu0 %v78, 24
    %v80 = vpop.permute.xlu0 %79
    %vm81 = vcmask 261312
    %82 = vst.msk [vmem:[#allocation0] sm:$0x1] %vm81, %v80
    %s83 = scalar_lea.vmem %s0, 2
    %v84 = vld [vmem:[%s83] sm:$0x1]
    %85 = vrot.lane.b32.xlu0 %v84, 16
    %v86 = vpop.permute.xlu0 %85
    %vm87 = vcmask 195712
    %88 = vst.msk [vmem:[#allocation0] sm:$0x1] %vm87, %v86
    %s89 = scalar_lea.vmem %s0, 1
    %v90 = vld [vmem:[%s89] sm:$0x1]
    %91 = vrot.lane.b32.xlu0 %v90, 8
    %v92 = vpop.permute.xlu0 %91
    %vm93 = vcmask 130112
    %94 = vst.msk [vmem:[#allocation0] sm:$0x1] %vm93, %v92
    %s96 = sshll.u32 1, 1
    %s97 = ssub.s32 %s96, 1
    %v99 = vld [vmem:[#allocation0] sm:%s97]
    %s100 = sshll.u32 1, 1
    %s101 = ssub.s32 %s100, 1
    %102 = vst [vmem:[%s1] sm:%s101] %v99

// kernel: upsample_layer_forward.1
$region0: #{upsample_layer_forward.1}
  #allocation0 [shape = 'u32[]', space=smem, size = 0x4, offset = 0x4, fixed_abs, tag = 'smem constant byte address 0x4 - core index']
  #allocation1 [shape = 'u32[144,128]{1,0:T(1,128)}', space=vmem, size = 0x12000, scoped, tag = 'internal scratch']
  #allocation2 [shape = 'f32[18,72]{1,0:T(8,128)}', space=vmem, size = 0x3000, scoped, tag = 'scratch operand']
  #allocation3 [shape = 'f32[18,144]{1,0:T(8,128)}', space=vmem, size = 0x6000, scoped, tag = 'scratch operand']
  #allocation4 [shape = 'f32[17,136]{1,0:T(8,128)}', space=vmem, size = 0x6000, scoped, tag = 'scratch operand']
  %s0 = inlined_call_operand.vmem [shape: f32[2,16,64], index: 0, kind: input, shape index: {}]
  %s1 = inlined_call_operand.vmem [shape: f32[3,72,128], index: 1, kind: input, shape index: {}]
  %s2 = inlined_call_operand.vmem [shape: f32[1,128], index: 2, kind: input, shape index: {}]
  %s3 = inlined_call_operand.vmem [shape: f32[3,144,128], index: 3, kind: input, shape index: {}]
  %s4 = inlined_call_operand.vmem [shape: f32[1,128], index: 4, kind: input, shape index: {}]
  %s5 = inlined_call_operand.vmem [shape: f32[2,136,256], index: 5, kind: input, shape index: {}]
  %s6 = inlined_call_operand.vmem [shape: f32[1,256], index: 6, kind: input, shape index: {}]
  %s7 = inlined_call_operand.vmem [shape: f32[2,16,256], index: 7, kind: output, shape index: {}]
  %s8 = sld [smem:[#allocation0]]
  $region61: #{upsample_layer_forward.1} parent=0
    _
  %s10 = ssub.s32 1, %s8
  %s11 = scalar_select 0, %s10, %s8
  loop: start=0, step=1, limit=4
  $region2: #{upsample_layer_forward.1} parent=0 // loop_pre_header
    _
  $region3: #{upsample_layer_forward.1} parent=0 // loop_header
    %s13 = sphi 0, %s17
    %p14 = scmp.ge.s32.totalorder %s13, 4
    %s23 = sphi 0, %s25
    %s26 = sphi 0, %s23
    %s27 = sphi 0, %s26
    %s43 = sphi 0, %s27
    %s47 = sphi 0, %s47
    %s49 = sphi 0, %s47
    %s50 = sphi 0, %s49
    %s64 = sphi 0, %s50
    %s68 = sphi 0, %s68
    %s70 = sphi 0, %s68
    %s71 = sphi 0, %s70
    %s85 = sphi 0, %s71
    %s89 = sphi 0, %s89
    %s91 = sphi 0, %s89
    %s92 = sphi 0, %s91
    %s106 = sphi 0, %s92
    %s110 = sphi 0, %s110
    %s112 = sphi 0, %s110
    %s113 = sphi 0, %s112
    %s127 = sphi 0, %s113
    %s131 = sphi 0, %s131
    %s133 = sphi 0, %s131
    %s134 = sphi 0, %s133
    %s148 = sphi 0, %s134
    %s152 = sphi 0, %s152
    %s154 = sphi 0, %s152
    %s155 = sphi 0, %s154
    %s169 = sphi 0, %s155
    %s175 = sphi 0, %s177
    %s178 = sphi 0, %s175
    %s179 = sphi 0, %s178
    %s195 = sphi 0, %s179
  $region4: #{upsample_layer_forward.1} parent=0 // loop_header_branch
    %16 = sbr.rel (%p14) target = $region8
  $region5: #{upsample_layer_forward.1} parent=0 // loop_body
    %s18 = ssub.s32 %s13, 1
    %s19 = ssub.s32 %s13, 2
    %s20 = sadd.s32 %s13, 1
    %s21 = ssub.s32 %s13, %s20
    %p22 = scmp.eq.s32.totalorder %s21, 0
    %s24 = sadd.s32 %s23, 1
    %s25 = scalar_select %p22, %s23, %s24
    %p28 = pneg %p22
    %p29 = scmp.eq.s32.totalorder %s13, 1
    %p30 = por %p28, %p29
    %p31 = scmp.ne.s32.totalorder %s23, %s26
    %p32 = scmp.eq.s32.totalorder %s13, 0
    %p33 = por %p31, %p32
    %p34 = scmp.ne.s32.totalorder %s23, %s26
    %p35 = scmp.eq.s32.totalorder %s18, 1
    %p36 = por %p34, %p35
    %p37 = scmp.ne.s32.totalorder %s26, %s27
    %p38 = scmp.eq.s32.totalorder %s18, 0
    %p39 = por %p37, %p38
    %p40 = scmp.ne.s32.totalorder %s26, %s27
    %p41 = scmp.eq.s32.totalorder %s19, 1
    %p42 = por %p40, %p41
    %p44 = scmp.ne.s32.totalorder %s27, %s43
    %p45 = scmp.eq.s32.totalorder %s19, 0
    %p46 = por %p44, %p45
    %s48 = sadd.s32 %s47, 1
    %p51 = scmp.eq.s32.totalorder %s13, 1
    %p52 = scmp.ne.s32.totalorder %s47, %s49
    %p53 = scmp.eq.s32.totalorder %s13, 0
    %p54 = por %p52, %p53
    %p55 = scmp.ne.s32.totalorder %s47, %s49
    %p56 = scmp.eq.s32.totalorder %s18, 1
    %p57 = por %p55, %p56
    %p58 = scmp.ne.s32.totalorder %s49, %s50
    %p59 = scmp.eq.s32.totalorder %s18, 0
    %p60 = por %p58, %p59
    %p61 = scmp.ne.s32.totalorder %s49, %s50
    %p62 = scmp.eq.s32.totalorder %s19, 1
    %p63 = por %p61, %p62
    %p65 = scmp.ne.s32.totalorder %s50, %s64
    %p66 = scmp.eq.s32.totalorder %s19, 0
    %p67 = por %p65, %p66
    %s69 = sadd.s32 %s68, 1
    %p72 = scmp.eq.s32.totalorder %s13, 1
    %p73 = scmp.ne.s32.totalorder %s68, %s70
    %p74 = scmp.eq.s32.totalorder %s13, 0
    %p75 = por %p73, %p74
    %p76 = scmp.ne.s32.totalorder %s68, %s70
    %p77 = scmp.eq.s32.totalorder %s18, 1
    %p78 = por %p76, %p77
    %p79 = scmp.ne.s32.totalorder %s70, %s71
    %p80 = scmp.eq.s32.totalorder %s18, 0
    %p81 = por %p79, %p80
    %p82 = scmp.ne.s32.totalorder %s70, %s71
    %p83 = scmp.eq.s32.totalorder %s19, 1
    %p84 = por %p82, %p83
    %p86 = scmp.ne.s32.totalorder %s71, %s85
    %p87 = scmp.eq.s32.totalorder %s19, 0
    %p88 = por %p86, %p87
    %s90 = sadd.s32 %s89, 1
    %p93 = scmp.eq.s32.totalorder %s13, 1
    %p94 = scmp.ne.s32.totalorder %s89, %s91
    %p95 = scmp.eq.s32.totalorder %s13, 0
    %p96 = por %p94, %p95
    %p97 = scmp.ne.s32.totalorder %s89, %s91
    %p98 = scmp.eq.s32.totalorder %s18, 1
    %p99 = por %p97, %p98
    %p100 = scmp.ne.s32.totalorder %s91, %s92
    %p101 = scmp.eq.s32.totalorder %s18, 0
    %p102 = por %p100, %p101
    %p103 = scmp.ne.s32.totalorder %s91, %s92
    %p104 = scmp.eq.s32.totalorder %s19, 1
    %p105 = por %p103, %p104
    %p107 = scmp.ne.s32.totalorder %s92, %s106
    %p108 = scmp.eq.s32.totalorder %s19, 0
    %p109 = por %p107, %p108
    %s111 = sadd.s32 %s110, 1
    %p114 = scmp.eq.s32.totalorder %s13, 1
    %p115 = scmp.ne.s32.totalorder %s110, %s112
    %p116 = scmp.eq.s32.totalorder %s13, 0
    %p117 = por %p115, %p116
    %p118 = scmp.ne.s32.totalorder %s110, %s112
    %p119 = scmp.eq.s32.totalorder %s18, 1
    %p120 = por %p118, %p119
    %p121 = scmp.ne.s32.totalorder %s112, %s113
    %p122 = scmp.eq.s32.totalorder %s18, 0
    %p123 = por %p121, %p122
    %p124 = scmp.ne.s32.totalorder %s112, %s113
    %p125 = scmp.eq.s32.totalorder %s19, 1
    %p126 = por %p124, %p125
    %p128 = scmp.ne.s32.totalorder %s113, %s127
    %p129 = scmp.eq.s32.totalorder %s19, 0
    %p130 = por %p128, %p129
    %s132 = sadd.s32 %s131, 1
    %p135 = scmp.eq.s32.totalorder %s13, 1
    %p136 = scmp.ne.s32.totalorder %s131, %s133
    %p137 = scmp.eq.s32.totalorder %s13, 0
    %p138 = por %p136, %p137
    %p139 = scmp.ne.s32.totalorder %s131, %s133
    %p140 = scmp.eq.s32.totalorder %s18, 1
    %p141 = por %p139, %p140
    %p142 = scmp.ne.s32.totalorder %s133, %s134
    %p143 = scmp.eq.s32.totalorder %s18, 0
    %p144 = por %p142, %p143
    %p145 = scmp.ne.s32.totalorder %s133, %s134
    %p146 = scmp.eq.s32.totalorder %s19, 1
    %p147 = por %p145, %p146
    %p149 = scmp.ne.s32.totalorder %s134, %s148
    %p150 = scmp.eq.s32.totalorder %s19, 0
    %p151 = por %p149, %p150
    %s153 = sadd.s32 %s152, 1
    %p156 = scmp.eq.s32.totalorder %s13, 1
    %p157 = scmp.ne.s32.totalorder %s152, %s154
    %p158 = scmp.eq.s32.totalorder %s13, 0
    %p159 = por %p157, %p158
    %p160 = scmp.ne.s32.totalorder %s152, %s154
    %p161 = scmp.eq.s32.totalorder %s18, 1
    %p162 = por %p160, %p161
    %p163 = scmp.ne.s32.totalorder %s154, %s155
    %p164 = scmp.eq.s32.totalorder %s18, 0
    %p165 = por %p163, %p164
    %p166 = scmp.ne.s32.totalorder %s154, %s155
    %p167 = scmp.eq.s32.totalorder %s19, 1
    %p168 = por %p166, %p167
    %p170 = scmp.ne.s32.totalorder %s155, %s169
    %p171 = scmp.eq.s32.totalorder %s19, 0
    %p172 = por %p170, %p171
    %s173 = ssub.s32 %s13, %s20
    %p174 = scmp.eq.s32.totalorder %s173, 0
    %s176 = sadd.s32 %s175, 1
    %s177 = scalar_select %p174, %s175, %s176
    %p180 = pneg %p174
    %p181 = scmp.eq.s32.totalorder %s13, 1
    %p182 = por %p180, %p181
    %p183 = scmp.ne.s32.totalorder %s175, %s178
    %p184 = scmp.eq.s32.totalorder %s13, 0
    %p185 = por %p183, %p184
    %p186 = scmp.ne.s32.totalorder %s175, %s178
    %p187 = scmp.eq.s32.totalorder %s18, 1
    %p188 = por %p186, %p187
    %p189 = scmp.ne.s32.totalorder %s178, %s179
    %p190 = scmp.eq.s32.totalorder %s18, 0
    %p191 = por %p189, %p190
    %p192 = scmp.ne.s32.totalorder %s178, %s179
    %p193 = scmp.eq.s32.totalorder %s19, 1
    %p194 = por %p192, %p193
    %p196 = scmp.ne.s32.totalorder %s179, %s195
    %p197 = scmp.eq.s32.totalorder %s19, 0
    %p198 = por %p196, %p197
    %p199 = scmp.le.s32.totalorder 1, %s13
    %p200 = scmp.lt.s32.totalorder %s13, 3
    %p201 = pnand %p199, %p200
    %p202 = pneg %p201
    // Predicated region
    $region9: #{upsample_layer_forward.1} parent=5 // pred_check
      _
    $region10: #{upsample_layer_forward.1} parent=5 // pred_check_branch
      %204 = sbr.rel (%p201) target = $region12
    $region11: #{upsample_layer_forward.1} parent=5 // pred_region
      %s205 = ssub.s32 %s13, 1
      // Predicated region
      $region13: #{upsample_layer_forward.1} parent=11 // pred_check
        %p206 = pneg %p60
      $region14: #{upsample_layer_forward.1} parent=11 // pred_check_branch
        %208 = sbr.rel (%p206) target = $region16
      $region15: #{upsample_layer_forward.1} parent=11 // pred_region
        _
      $region16: #{upsample_layer_forward.1} parent=11 // pred_fallthru
        _
      // Predicated region
      $region17: #{upsample_layer_forward.1} parent=11 // pred_check
        %p209 = pneg %p81
      $region18: #{upsample_layer_forward.1} parent=11 // pred_check_branch
        %211 = sbr.rel (%p209) target = $region20
      $region19: #{upsample_layer_forward.1} parent=11 // pred_region
        _
      $region20: #{upsample_layer_forward.1} parent=11 // pred_fallthru
        _
      // Predicated region
      $region21: #{upsample_layer_forward.1} parent=11 // pred_check
        %p212 = pneg %p102
      $region22: #{upsample_layer_forward.1} parent=11 // pred_check_branch
        %214 = sbr.rel (%p212) target = $region24
      $region23: #{upsample_layer_forward.1} parent=11 // pred_region
        _
      $region24: #{upsample_layer_forward.1} parent=11 // pred_fallthru
        _
      // Predicated region
      $region25: #{upsample_layer_forward.1} parent=11 // pred_check
        %p215 = pneg %p123
      $region26: #{upsample_layer_forward.1} parent=11 // pred_check_branch
        %217 = sbr.rel (%p215) target = $region28
      $region27: #{upsample_layer_forward.1} parent=11 // pred_region
        _
      $region28: #{upsample_layer_forward.1} parent=11 // pred_fallthru
        _
      // Predicated region
      $region29: #{upsample_layer_forward.1} parent=11 // pred_check
        %p218 = pneg %p144
      $region30: #{upsample_layer_forward.1} parent=11 // pred_check_branch
        %220 = sbr.rel (%p218) target = $region32
      $region31: #{upsample_layer_forward.1} parent=11 // pred_region
        _
      $region32: #{upsample_layer_forward.1} parent=11 // pred_fallthru
        _
      // Predicated region
      $region33: #{upsample_layer_forward.1} parent=11 // pred_check
        %p221 = pneg %p165
      $region34: #{upsample_layer_forward.1} parent=11 // pred_check_branch
        %223 = sbr.rel (%p221) target = $region36
      $region35: #{upsample_layer_forward.1} parent=11 // pred_region
        _
      $region36: #{upsample_layer_forward.1} parent=11 // pred_fallthru
        _
    $region12: #{upsample_layer_forward.1} parent=5 // pred_fallthru
      _
    %p224 = scmp.lt.s32.totalorder %s13, 2
    // Predicated region
    $region37: #{upsample_layer_forward.1} parent=5 // pred_check
      %p225 = pneg %p224
    $region38: #{upsample_layer_forward.1} parent=5 // pred_check_branch
      %227 = sbr.rel (%p225) target = $region40
    $region39: #{upsample_layer_forward.1} parent=5 // pred_region
      // Predicated region
      $region41: #{upsample_layer_forward.1} parent=39 // pred_check
        %p228 = pneg %p33
      $region42: #{upsample_layer_forward.1} parent=39 // pred_check_branch
        %230 = sbr.rel (%p228) target = $region44
      $region43: #{upsample_layer_forward.1} parent=39 // pred_region
        %p231 = scmp.lt.s32.totalorder %s13, 1
        %s232 = scalar_select %p231, %s13, 1
        %s233 = smul.addr %s232, 2
        %s234 = smul.addr %s233, 8
        %s235 = scalar_lea.vmem %s0, %s234
      $region44: #{upsample_layer_forward.1} parent=39 // pred_fallthru
        _
    $region40: #{upsample_layer_forward.1} parent=5 // pred_fallthru
      _
    %p236 = scmp.le.s32.totalorder 1, %s13
    %p237 = scmp.lt.s32.totalorder %s13, 3
    %p238 = pnand %p236, %p237
    %p239 = pneg %p238
    // Predicated region
    $region45: #{upsample_layer_forward.1} parent=5 // pred_check
      _
    $region46: #{upsample_layer_forward.1} parent=5 // pred_check_branch
      %241 = sbr.rel (%p238) target = $region48
    $region47: #{upsample_layer_forward.1} parent=5 // pred_region
      %s242 = ssub.s32 %s13, 1
      %p243 = scmp.lt.s32.totalorder %s18, 1
      %s244 = scalar_select %p243, %s18, 1
      %s245 = smul.addr %s244, 2
      %s246 = smul.addr %s245, 8
      %s247 = scalar_lea.vmem %s0, %s246
      %p248 = pneg %p39
      %p249 = pneg %p36
      %p250 = pneg %p60
      %p251 = pneg %p57
      %p252 = pneg %p81
      %p253 = pneg %p78
      %p254 = pneg %p102
      %p255 = pneg %p99
      %p256 = pneg %p123
      %p257 = pneg %p120
      %p258 = pneg %p144
      %p259 = pneg %p141
      %p260 = pneg %p165
      %p261 = pneg %p162
      %p262 = pneg %p191
      %p263 = pneg %p188
      %p264 = scmp.lt.s32.totalorder %s18, 1
      %s265 = scalar_select %p264, %s18, 1
      %s266 = smul.addr %s265, 4
      %s267 = smul.addr %s266, 8
      %s268 = scalar_lea.vmem %s7, %s267
      %p269 = scmp.lt.s32.totalorder %s18, 1
      %s270 = scalar_select %p269, %s18, 1
      %s271 = smul.addr %s270, 2
      %s272 = smul.addr %s271, 8
      %s273 = scalar_lea.vmem %s0, %s272
      %p274 = scmp.lt.s32.totalorder %s18, 1
      %s275 = scalar_select %p274, %s18, 1
      %s276 = smul.addr %s275, 4
      %s277 = smul.addr %s276, 8
      %s278 = scalar_lea.vmem %s7, %s277
      %vm279 = vcmask 581632
      %280 = vst.msk [vmem:[#allocation2] sm:$0x1] %vm279, 0.0
      %281 = vst.msk [vmem:[#allocation2 + $0x11] sm:$0x1] %vm279, 0.0
      %vm282 = vcmask 31744
      %283 = vst.msk [vmem:[#allocation2] sm:$0xff] %vm282, 0.0
      %284 = vst.msk [vmem:[#allocation2 + $0x8] sm:$0xff] %vm282, 0.0
      %vm285 = vcmask 25600
      %286 = vst.msk [vmem:[#allocation2 + $0x10] sm:$0x3] %vm285, 0.0
      %vm287 = vcmask 589344
      %288 = vst.msk [vmem:[#allocation2] sm:$0xff] %vm287, 0.0
      %289 = vst.msk [vmem:[#allocation2 + $0x8] sm:$0xff] %vm287, 0.0
      %vm290 = vcmask 583200
      %291 = vst.msk [vmem:[#allocation2 + $0x10] sm:$0x3] %vm290, 0.0
      %v292 = vld [vmem:[%s273] sm:$0xff]
      %v293 = vld [vmem:[%s273 + $0x8] sm:$0xff]
      %296 = vrot.lane.b32.xlu0 %v292, 4
      %v297 = vpop.permute.xlu0 %296
      %298 = vrot.lane.b32.xlu0 %v293, 4
      %v299 = vpop.permute.xlu0 %298
      %vm302 = vcmask 556064
      %303 = vst.msk [vmem:[#allocation2 + $0x1] sm:$0xff] %vm302, %v297
      %304 = vst.msk [vmem:[#allocation2 + $0x9] sm:$0xff] %vm302, %v299
      %v305 = vld [vmem:[#allocation2] sm:$0xff]
      %v306 = vld [vmem:[#allocation2 + $0x8] sm:$0xff]
      %v307 = vld [vmem:[%s1] sm:$0xff]
      %v308 = vld [vmem:[%s1 + $0x8] sm:$0xff]
      %v309 = vld [vmem:[%s1 + $0x10] sm:$0xff]
      %v310 = vld [vmem:[%s1 + $0x18] sm:$0xff]
      %v311 = vld [vmem:[%s1 + $0x20] sm:$0xff]
      %v312 = vld [vmem:[%s1 + $0x28] sm:$0xff]
      %v313 = vld [vmem:[%s1 + $0x30] sm:$0xff]
      %v314 = vld [vmem:[%s1 + $0x38] sm:$0xff]
      %v315 = vld [vmem:[%s1 + $0x40] sm:$0xff]
      %v316 = vld [vmem:[#allocation2 + $0x1] sm:$0xff]
      %v317 = vld [vmem:[#allocation2 + $0x9] sm:$0xff]
      %s318 = scalar_lea.vmem %s1, 72
      %v319 = vld [vmem:[%s318] sm:$0xff]
      %v320 = vld [vmem:[%s318 + $0x8] sm:$0xff]
      %v321 = vld [vmem:[%s318 + $0x10] sm:$0xff]
      %v322 = vld [vmem:[%s318 + $0x18] sm:$0xff]
      %v323 = vld [vmem:[%s318 + $0x20] sm:$0xff]
      %v324 = vld [vmem:[%s318 + $0x28] sm:$0xff]
      %v325 = vld [vmem:[%s318 + $0x30] sm:$0xff]
      %v326 = vld [vmem:[%s318 + $0x38] sm:$0xff]
      %v327 = vld [vmem:[%s318 + $0x40] sm:$0xff]
      %vm328 = vcmask 588800
      %v330 = vsel %vm328, %v316, 0
      %v333 = vsel %vm328, %v317, 0
      %335 = vmatprep.subr.mxu0 0.0
      %336 = vmatpush1.msra.mxu0 0.0
      %337 = vmatprep.subr.mxu0 0.0
      %338 = vmatpush1.msra.mxu0 0.0
      %339 = vmatprep.subr.mxu0 0.0
      %340 = vmatpush1.msra.mxu0 0.0
      %341 = vmatprep.subr.mxu0 0.0
      %342 = vmatpush1.msra.mxu0 0.0
      %343 = vmatprep.subr.mxu0 0.0
      %344 = vmatpush1.msra.mxu0 0.0
      %345 = vmatprep.subr.mxu0 0.0
      %346 = vmatpush1.msra.mxu0 0.0
      %347 = vmatprep.subr.mxu0 0.0
      %348 = vmatpush1.msra.mxu0 0.0
      %349 = vmatprep.subr.mxu0 0.0
      %350 = vmatpush1.msra.mxu0 %v327
      %351 = vmatprep.subr.mxu0 0.0
      %352 = vmatpush1.msra.mxu0 %v326
      %353 = vmatprep.subr.mxu0 0.0
      %354 = vmatpush1.msra.mxu0 %v325
      %355 = vmatprep.subr.mxu0 0.0
      %356 = vmatpush1.msra.mxu0 %v324
      %357 = vmatprep.subr.mxu0 0.0
      %358 = vmatpush1.msra.mxu0 %v323
      %359 = vmatprep.subr.mxu0 0.0
      %360 = vmatpush1.msra.mxu0 %v322
      %361 = vmatprep.subr.mxu0 0.0
      %362 = vmatpush1.msra.mxu0 %v321
      %363 = vmatprep.subr.mxu0 0.0
      %364 = vmatpush1.msra.mxu0 %v320
      %365 = vmatprep.subr.mxu0 0.0
      %366 = vmatpush1.msra.mxu0 %v319
      %367 = vmatprep.subr.mxu0 0.0
      %368 = vmatpush2.msra.mxu0 0.0
      %369 = vmatprep.subr.mxu0 0.0
      %370 = vmatpush2.msra.mxu0 0.0
      %371 = vmatprep.subr.mxu0 0.0
      %372 = vmatpush2.msra.mxu0 0.0
      %373 = vmatprep.subr.mxu0 0.0
      %374 = vmatpush2.msra.mxu0 0.0
      %375 = vmatprep.subr.mxu0 0.0
      %376 = vmatpush2.msra.mxu0 0.0
      %377 = vmatprep.subr.mxu0 0.0
      %378 = vmatpush2.msra.mxu0 0.0
      %379 = vmatprep.subr.mxu0 0.0
      %380 = vmatpush2.msra.mxu0 0.0
      %381 = vmatprep.subr.mxu0 0.0
      %382 = vmatpush2.msra.mxu0 0.0
      %383 = vmatprep.subr.mxu0 0.0
      %384 = vmatpush2.msra.mxu0 0.0
      %385 = vmatprep.subr.mxu0 0.0
      %386 = vmatpush2.msra.mxu0 0.0
      %387 = vmatprep.subr.mxu0 0.0
      %388 = vmatpush2.msra.mxu0 0.0
      %389 = vmatprep.subr.mxu0 0.0
      %390 = vmatpush2.msra.mxu0 0.0
      %391 = vmatprep.subr.mxu0 0.0
      %392 = vmatpush2.msra.mxu0 0.0
      %393 = vmatprep.subr.mxu0 0.0
      %394 = vmatpush2.msra.mxu0 0.0
      %395 = vmatprep.subr.mxu0 0.0
      %396 = vmatpush2.msra.mxu0 0.0
      %397 = vmatprep.subr.mxu0 0.0
      %398 = vmatpush2.msra.mxu0 0.0
      %399 = vmatprep.mubr.f32.mxu0 0.0
      %400 = vmatmul.mubr.f32.gmra.mxu0 %v330
      %v401 = vpop.f32.mrf.mxu0
      %v402 = vadd.f32 0.0, %v401
      %v403 = vpop.f32.mrf.mxu0
      %404 = vmatprep.mubr.f32.mxu0 0.0
      %405 = vmatmul.mubr.f32.gmra.mxu0 %v333
      %v406 = vpop.f32.mrf.mxu0
      %v407 = vadd.f32 0.0, %v406
      %v408 = vpop.f32.mrf.mxu0
      %409 = vdwg.mxu0
      %v411 = vsel %vm328, %v305, 0
      %v414 = vsel %vm328, %v306, 0
      %416 = vmatprep.subr.mxu0 0.0
      %417 = vmatpush1.msra.mxu0 0.0
      %418 = vmatprep.subr.mxu0 0.0
      %419 = vmatpush1.msra.mxu0 0.0
      %420 = vmatprep.subr.mxu0 0.0
      %421 = vmatpush1.msra.mxu0 0.0
      %422 = vmatprep.subr.mxu0 0.0
      %423 = vmatpush1.msra.mxu0 0.0
      %424 = vmatprep.subr.mxu0 0.0
      %425 = vmatpush1.msra.mxu0 0.0
      %426 = vmatprep.subr.mxu0 0.0
      %427 = vmatpush1.msra.mxu0 0.0
      %428 = vmatprep.subr.mxu0 0.0
      %429 = vmatpush1.msra.mxu0 0.0
      %430 = vmatprep.subr.mxu0 0.0
      %431 = vmatpush1.msra.mxu0 %v315
      %432 = vmatprep.subr.mxu0 0.0
      %433 = vmatpush1.msra.mxu0 %v314
      %434 = vmatprep.subr.mxu0 0.0
      %435 = vmatpush1.msra.mxu0 %v313
      %436 = vmatprep.subr.mxu0 0.0
      %437 = vmatpush1.msra.mxu0 %v312
      %438 = vmatprep.subr.mxu0 0.0
      %439 = vmatpush1.msra.mxu0 %v311
      %440 = vmatprep.subr.mxu0 0.0
      %441 = vmatpush1.msra.mxu0 %v310
      %442 = vmatprep.subr.mxu0 0.0
      %443 = vmatpush1.msra.mxu0 %v309
      %444 = vmatprep.subr.mxu0 0.0
      %445 = vmatpush1.msra.mxu0 %v308
      %446 = vmatprep.subr.mxu0 0.0
      %447 = vmatpush1.msra.mxu0 %v307
      %448 = vmatprep.subr.mxu0 0.0
      %449 = vmatpush2.msra.mxu0 0.0
      %450 = vmatprep.subr.mxu0 0.0
      %451 = vmatpush2.msra.mxu0 0.0
      %452 = vmatprep.subr.mxu0 0.0
      %453 = vmatpush2.msra.mxu0 0.0
      %454 = vmatprep.subr.mxu0 0.0
      %455 = vmatpush2.msra.mxu0 0.0
      %456 = vmatprep.subr.mxu0 0.0
      %457 = vmatpush2.msra.mxu0 0.0
      %458 = vmatprep.subr.mxu0 0.0
      %459 = vmatpush2.msra.mxu0 0.0
      %460 = vmatprep.subr.mxu0 0.0
      %461 = vmatpush2.msra.mxu0 0.0
      %462 = vmatprep.subr.mxu0 0.0
      %463 = vmatpush2.msra.mxu0 0.0
      %464 = vmatprep.subr.mxu0 0.0
      %465 = vmatpush2.msra.mxu0 0.0
      %466 = vmatprep.subr.mxu0 0.0
      %467 = vmatpush2.msra.mxu0 0.0
      %468 = vmatprep.subr.mxu0 0.0
      %469 = vmatpush2.msra.mxu0 0.0
      %470 = vmatprep.subr.mxu0 0.0
      %471 = vmatpush2.msra.mxu0 0.0
      %472 = vmatprep.subr.mxu0 0.0
      %473 = vmatpush2.msra.mxu0 0.0
      %474 = vmatprep.subr.mxu0 0.0
      %475 = vmatpush2.msra.mxu0 0.0
      %476 = vmatprep.subr.mxu0 0.0
      %477 = vmatpush2.msra.mxu0 0.0
      %478 = vmatprep.subr.mxu0 0.0
      %479 = vmatpush2.msra.mxu0 0.0
      %480 = vmatprep.mubr.f32.mxu0 0.0
      %481 = vmatmul.mubr.f32.gmra.mxu0 %v411
      %v482 = vpop.f32.mrf.mxu0
      %v483 = vadd.f32 %v402, %v482
      %v484 = vpop.f32.mrf.mxu0
      %485 = vmatprep.mubr.f32.mxu0 0.0
      %486 = vmatmul.mubr.f32.gmra.mxu0 %v414
      %v487 = vpop.f32.mrf.mxu0
      %v488 = vadd.f32 %v407, %v487
      %v489 = vpop.f32.mrf.mxu0
      %490 = vdwg.mxu0
      %v491 = vld [vmem:[#allocation2 + $0x2] sm:$0xff]
      %v492 = vld [vmem:[#allocation2 + $0xa] sm:$0xff]
      %s493 = scalar_lea.vmem %s1, 144
      %v494 = vld [vmem:[%s493] sm:$0xff]
      %v495 = vld [vmem:[%s493 + $0x8] sm:$0xff]
      %v496 = vld [vmem:[%s493 + $0x10] sm:$0xff]
      %v497 = vld [vmem:[%s493 + $0x18] sm:$0xff]
      %v498 = vld [vmem:[%s493 + $0x20] sm:$0xff]
      %v499 = vld [vmem:[%s493 + $0x28] sm:$0xff]
      %v500 = vld [vmem:[%s493 + $0x30] sm:$0xff]
      %v501 = vld [vmem:[%s493 + $0x38] sm:$0xff]
      %v502 = vld [vmem:[%s493 + $0x40] sm:$0xff]
      %v504 = vsel %vm328, %v491, 0
      %v507 = vsel %vm328, %v492, 0
      %509 = vmatprep.subr.mxu0 0.0
      %510 = vmatpush1.msra.mxu0 0.0
      %511 = vmatprep.subr.mxu0 0.0
      %512 = vmatpush1.msra.mxu0 0.0
      %513 = vmatprep.subr.mxu0 0.0
      %514 = vmatpush1.msra.mxu0 0.0
      %515 = vmatprep.subr.mxu0 0.0
      %516 = vmatpush1.msra.mxu0 0.0
      %517 = vmatprep.subr.mxu0 0.0
      %518 = vmatpush1.msra.mxu0 0.0
      %519 = vmatprep.subr.mxu0 0.0
      %520 = vmatpush1.msra.mxu0 0.0
      %521 = vmatprep.subr.mxu0 0.0
      %522 = vmatpush1.msra.mxu0 0.0
      %523 = vmatprep.subr.mxu0 0.0
      %524 = vmatpush1.msra.mxu0 %v502
      %525 = vmatprep.subr.mxu0 0.0
      %526 = vmatpush1.msra.mxu0 %v501
      %527 = vmatprep.subr.mxu0 0.0
      %528 = vmatpush1.msra.mxu0 %v500
      %529 = vmatprep.subr.mxu0 0.0
      %530 = vmatpush1.msra.mxu0 %v499
      %531 = vmatprep.subr.mxu0 0.0
      %532 = vmatpush1.msra.mxu0 %v498
      %533 = vmatprep.subr.mxu0 0.0
      %534 = vmatpush1.msra.mxu0 %v497
      %535 = vmatprep.subr.mxu0 0.0
      %536 = vmatpush1.msra.mxu0 %v496
      %537 = vmatprep.subr.mxu0 0.0
      %538 = vmatpush1.msra.mxu0 %v495
      %539 = vmatprep.subr.mxu0 0.0
      %540 = vmatpush1.msra.mxu0 %v494
      %541 = vmatprep.subr.mxu0 0.0
      %542 = vmatpush2.msra.mxu0 0.0
      %543 = vmatprep.subr.mxu0 0.0
      %544 = vmatpush2.msra.mxu0 0.0
      %545 = vmatprep.subr.mxu0 0.0
      %546 = vmatpush2.msra.mxu0 0.0
      %547 = vmatprep.subr.mxu0 0.0
      %548 = vmatpush2.msra.mxu0 0.0
      %549 = vmatprep.subr.mxu0 0.0
      %550 = vmatpush2.msra.mxu0 0.0
      %551 = vmatprep.subr.mxu0 0.0
      %552 = vmatpush2.msra.mxu0 0.0
      %553 = vmatprep.subr.mxu0 0.0
      %554 = vmatpush2.msra.mxu0 0.0
      %555 = vmatprep.subr.mxu0 0.0
      %556 = vmatpush2.msra.mxu0 0.0
      %557 = vmatprep.subr.mxu0 0.0
      %558 = vmatpush2.msra.mxu0 0.0
      %559 = vmatprep.subr.mxu0 0.0
      %560 = vmatpush2.msra.mxu0 0.0
      %561 = vmatprep.subr.mxu0 0.0
      %562 = vmatpush2.msra.mxu0 0.0
      %563 = vmatprep.subr.mxu0 0.0
      %564 = vmatpush2.msra.mxu0 0.0
      %565 = vmatprep.subr.mxu0 0.0
      %566 = vmatpush2.msra.mxu0 0.0
      %567 = vmatprep.subr.mxu0 0.0
      %568 = vmatpush2.msra.mxu0 0.0
      %569 = vmatprep.subr.mxu0 0.0
      %570 = vmatpush2.msra.mxu0 0.0
      %571 = vmatprep.subr.mxu0 0.0
      %572 = vmatpush2.msra.mxu0 0.0
      %573 = vmatprep.mubr.f32.mxu0 0.0
      %574 = vmatmul.mubr.f32.gmra.mxu0 %v504
      %v575 = vpop.f32.mrf.mxu0
      %v576 = vadd.f32 0.0, %v575
      %v577 = vpop.f32.mrf.mxu0
      %578 = vmatprep.mubr.f32.mxu0 0.0
      %579 = vmatmul.mubr.f32.gmra.mxu0 %v507
      %v580 = vpop.f32.mrf.mxu0
      %v581 = vadd.f32 0.0, %v580
      %v582 = vpop.f32.mrf.mxu0
      %583 = vdwg.mxu0
      %v584 = vadd.f32 %v483, %v576
      %v585 = vadd.f32 %v488, %v581
      %v586 = vld [vmem:[%s2] sm:$0x1]
      %v588 = vlaneseq
      %v589 = vshrl.u32 %v588, 7
      %v590 = vsub.s32 0, %v589
      %v591 = vrot.slane %v586, %v590
      %v593 = vadd.f32 %v584, %v591
      %v594 = vadd.f32 %v585, %v591
      %v595 = vmax.f32 %v593, 0.0
      %v596 = vmax.f32 %v594, 0.0
      %v597 = vlaneseq
      %vm598 = vcmp.ge.s32.totalorder %v597, 0
      %vm599 = vcmp.lt.s32.totalorder %v597, 144
      %vm600 = vmand %vm598, %vm599
      %601 = vst.msk [vmem:[#allocation3] ss:$8 sm:$0x3] %vm600, 0.0
      %602 = vst.msk [vmem:[#allocation3] ss:$8 sm:$0x0] %vm600, 0.0
      %s603 = scalar_lea.vmem [#allocation3], 33
      %604 = vst.msk [vmem:[%s603] ss:$8 sm:$0x3] %vm600, 0.0
      %605 = vst.msk [vmem:[%s603] ss:$8 sm:$0x0] %vm600, 0.0
      %vm606 = vcmask 64512
      %607 = vst.msk [vmem:[#allocation3] sm:$0xff] %vm606, 0.0
      %608 = vst.msk [vmem:[#allocation3 + $0x10] sm:$0xff] %vm606, 0.0
      %vm609 = vcmask 58368
      %610 = vst.msk [vmem:[#allocation3 + $0x20] sm:$0x3] %vm609, 0.0
      %vm611 = vcmask 130112
      %612 = vst.msk [vmem:[#allocation3 + $0x8] sm:$0xff] %vm611, 0.0
      %613 = vst.msk [vmem:[#allocation3 + $0x18] sm:$0xff] %vm611, 0.0
      %vm614 = vcmask 123968
      %615 = vst.msk [vmem:[#allocation3 + $0x28] sm:$0x3] %vm614, 0.0
      %vm618 = vcmask 1040384
      %v619 = vrot.slane %v595, 7
      %v620 = vrot.slane %v596, 7
      %v621 = vsel %vm618, %v619, %v620
      %622 = vrot.lane.b32.xlu0 %v619, 8
      %v623 = vpop.permute.xlu0 %622
      %624 = vrot.lane.b32.xlu0 %v621, 8
      %v625 = vpop.permute.xlu0 %624
      %626 = vrot.lane.b32.xlu0 %v620, 8
      %v627 = vpop.permute.xlu0 %626
      %vm631 = vcmask 1047617
      %632 = vst.msk [vmem:[#allocation3] sm:$0xfe] %vm631, %v623
      %vm633 = vcmask 64513
      %634 = vst.msk [vmem:[#allocation3 + $0x8] sm:$0xfe] %vm633, %v623
      %vm635 = vcmask 1047616
      %636 = vst.msk [vmem:[#allocation3 + $0x10] sm:$0xff] %vm635, %v625
      %637 = vst.msk [vmem:[#allocation3 + $0x18] sm:$0xff] %vm606, %v625
      %vm638 = vcmask 1040448
      %639 = vst.msk [vmem:[#allocation3 + $0x20] sm:$0x1] %vm638, %v627
      %vm640 = vcmask 57344
      %641 = vst.msk [vmem:[#allocation3 + $0x28] sm:$0x1] %vm640, %v627
      %v642 = vld [vmem:[#allocation3] sm:$0xff]
      %v643 = vld [vmem:[#allocation3 + $0x8] sm:$0xff]
      %v644 = vld [vmem:[#allocation3 + $0x10] sm:$0xff]
      %v645 = vld [vmem:[#allocation3 + $0x18] sm:$0xff]
      %v646 = vld [vmem:[%s3] sm:$0xff]
      %v647 = vld [vmem:[%s3 + $0x8] sm:$0xff]
      %v648 = vld [vmem:[%s3 + $0x10] sm:$0xff]
      %v649 = vld [vmem:[%s3 + $0x18] sm:$0xff]
      %v650 = vld [vmem:[%s3 + $0x20] sm:$0xff]
      %v651 = vld [vmem:[%s3 + $0x28] sm:$0xff]
      %v652 = vld [vmem:[%s3 + $0x30] sm:$0xff]
      %v653 = vld [vmem:[%s3 + $0x38] sm:$0xff]
      %v654 = vld [vmem:[%s3 + $0x40] sm:$0xff]
      %v655 = vld [vmem:[%s3 + $0x48] sm:$0xff]
      %v656 = vld [vmem:[%s3 + $0x50] sm:$0xff]
      %v657 = vld [vmem:[%s3 + $0x58] sm:$0xff]
      %v658 = vld [vmem:[%s3 + $0x60] sm:$0xff]
      %v659 = vld [vmem:[%s3 + $0x68] sm:$0xff]
      %v660 = vld [vmem:[%s3 + $0x70] sm:$0xff]
      %v661 = vld [vmem:[%s3 + $0x78] sm:$0xff]
      %v662 = vld [vmem:[%s3 + $0x80] sm:$0xff]
      %v663 = vld [vmem:[%s3 + $0x88] sm:$0xff]
      %v664 = vld [vmem:[#allocation3] sm:$0xfe]
      %v665 = vld [vmem:[#allocation3 + $0x8] sm:$0xfe]
      %v666 = vld [vmem:[#allocation3 + $0x20] sm:$0x1]
      %v667 = vld [vmem:[#allocation3 + $0x28] sm:$0x1]
      %s668 = scalar_lea.vmem %s3, 144
      %v669 = vld [vmem:[%s668] sm:$0xff]
      %v670 = vld [vmem:[%s668 + $0x8] sm:$0xff]
      %v671 = vld [vmem:[%s668 + $0x10] sm:$0xff]
      %v672 = vld [vmem:[%s668 + $0x18] sm:$0xff]
      %v673 = vld [vmem:[%s668 + $0x20] sm:$0xff]
      %v674 = vld [vmem:[%s668 + $0x28] sm:$0xff]
      %v675 = vld [vmem:[%s668 + $0x30] sm:$0xff]
      %v676 = vld [vmem:[%s668 + $0x38] sm:$0xff]
      %v677 = vld [vmem:[%s668 + $0x40] sm:$0xff]
      %v678 = vld [vmem:[%s668 + $0x48] sm:$0xff]
      %v679 = vld [vmem:[%s668 + $0x50] sm:$0xff]
      %v680 = vld [vmem:[%s668 + $0x58] sm:$0xff]
      %v681 = vld [vmem:[%s668 + $0x60] sm:$0xff]
      %v682 = vld [vmem:[%s668 + $0x68] sm:$0xff]
      %v683 = vld [vmem:[%s668 + $0x70] sm:$0xff]
      %v684 = vld [vmem:[%s668 + $0x78] sm:$0xff]
      %v685 = vld [vmem:[%s668 + $0x80] sm:$0xff]
      %v686 = vld [vmem:[%s668 + $0x88] sm:$0xff]
      %vm693 = vcmask 1046528
      %v694 = vrot.slane %v664, 1
      %v695 = vrot.slane %v644, 1
      %v696 = vsel %vm693, %v694, %v695
      %v697 = vrot.slane %v665, 1
      %v698 = vrot.slane %v645, 1
      %v699 = vsel %vm693, %v697, %v698
      %v700 = vrot.slane %v666, 1
      %v701 = vsel %vm693, %v695, %v700
      %v702 = vrot.slane %v667, 1
      %v703 = vsel %vm693, %v698, %v702
      %vm706 = vcmask 130048
      %v707 = vsel %vm706, %v699, 0
      %v709 = vsel %vm706, %v703, 0
      %711 = vmatprep.subr.mxu0 0.0
      %712 = vmatpush1.msra.mxu0 %v684
      %713 = vmatprep.subr.mxu0 0.0
      %714 = vmatpush1.msra.mxu0 %v683
      %715 = vmatprep.subr.mxu0 0.0
      %716 = vmatpush1.msra.mxu0 %v682
      %717 = vmatprep.subr.mxu0 0.0
      %718 = vmatpush1.msra.mxu0 %v681
      %719 = vmatprep.subr.mxu0 0.0
      %720 = vmatpush1.msra.mxu0 %v680
      %721 = vmatprep.subr.mxu0 0.0
      %722 = vmatpush1.msra.mxu0 %v679
      %723 = vmatprep.subr.mxu0 0.0
      %724 = vmatpush1.msra.mxu0 %v678
      %725 = vmatprep.subr.mxu0 0.0
      %726 = vmatpush1.msra.mxu0 %v677
      %727 = vmatprep.subr.mxu0 0.0
      %728 = vmatpush1.msra.mxu0 %v676
      %729 = vmatprep.subr.mxu0 0.0
      %730 = vmatpush1.msra.mxu0 %v675
      %731 = vmatprep.subr.mxu0 0.0
      %732 = vmatpush1.msra.mxu0 %v674
      %733 = vmatprep.subr.mxu0 0.0
      %734 = vmatpush1.msra.mxu0 %v673
      %735 = vmatprep.subr.mxu0 0.0
      %736 = vmatpush1.msra.mxu0 %v672
      %737 = vmatprep.subr.mxu0 0.0
      %738 = vmatpush1.msra.mxu0 %v671
      %739 = vmatprep.subr.mxu0 0.0
      %740 = vmatpush1.msra.mxu0 %v670
      %741 = vmatprep.subr.mxu0 0.0
      %742 = vmatpush1.msra.mxu0 %v669
      %743 = vmatprep.subr.mxu0 0.0
      %744 = vmatpush2.msra.mxu0 0.0
      %745 = vmatprep.subr.mxu0 0.0
      %746 = vmatpush2.msra.mxu0 0.0
      %747 = vmatprep.subr.mxu0 0.0
      %748 = vmatpush2.msra.mxu0 0.0
      %749 = vmatprep.subr.mxu0 0.0
      %750 = vmatpush2.msra.mxu0 0.0
      %751 = vmatprep.subr.mxu0 0.0
      %752 = vmatpush2.msra.mxu0 0.0
      %753 = vmatprep.subr.mxu0 0.0
      %754 = vmatpush2.msra.mxu0 0.0
      %755 = vmatprep.subr.mxu0 0.0
      %756 = vmatpush2.msra.mxu0 0.0
      %757 = vmatprep.subr.mxu0 0.0
      %758 = vmatpush2.msra.mxu0 0.0
      %759 = vmatprep.subr.mxu0 0.0
      %760 = vmatpush2.msra.mxu0 0.0
      %761 = vmatprep.subr.mxu0 0.0
      %762 = vmatpush2.msra.mxu0 0.0
      %763 = vmatprep.subr.mxu0 0.0
      %764 = vmatpush2.msra.mxu0 0.0
      %765 = vmatprep.subr.mxu0 0.0
      %766 = vmatpush2.msra.mxu0 0.0
      %767 = vmatprep.subr.mxu0 0.0
      %768 = vmatpush2.msra.mxu0 0.0
      %769 = vmatprep.subr.mxu0 0.0
      %770 = vmatpush2.msra.mxu0 0.0
      %771 = vmatprep.subr.mxu0 0.0
      %772 = vmatpush2.msra.mxu0 %v686
      %773 = vmatprep.subr.mxu0 0.0
      %774 = vmatpush2.msra.mxu0 %v685
      %775 = vmatprep.mubr.f32.mxu0 %v707
      %776 = vmatmul.mubr.f32.gmra.mxu0 %v696
      %v777 = vpop.f32.mrf.mxu0
      %v778 = vadd.f32 0.0, %v777
      %v779 = vpop.f32.mrf.mxu0
      %780 = vmatprep.mubr.f32.mxu0 %v709
      %781 = vmatmul.mubr.f32.gmra.mxu0 %v701
      %v782 = vpop.f32.mrf.mxu0
      %v783 = vadd.f32 0.0, %v782
      %v784 = vpop.f32.mrf.mxu0
      %785 = vdwg.mxu0
      %v787 = vsel %vm706, %v643, 0
      %v789 = vsel %vm706, %v645, 0
      %791 = vmatprep.subr.mxu0 0.0
      %792 = vmatpush1.msra.mxu0 %v661
      %793 = vmatprep.subr.mxu0 0.0
      %794 = vmatpush1.msra.mxu0 %v660
      %795 = vmatprep.subr.mxu0 0.0
      %796 = vmatpush1.msra.mxu0 %v659
      %797 = vmatprep.subr.mxu0 0.0
      %798 = vmatpush1.msra.mxu0 %v658
      %799 = vmatprep.subr.mxu0 0.0
      %800 = vmatpush1.msra.mxu0 %v657
      %801 = vmatprep.subr.mxu0 0.0
      %802 = vmatpush1.msra.mxu0 %v656
      %803 = vmatprep.subr.mxu0 0.0
      %804 = vmatpush1.msra.mxu0 %v655
      %805 = vmatprep.subr.mxu0 0.0
      %806 = vmatpush1.msra.mxu0 %v654
      %807 = vmatprep.subr.mxu0 0.0
      %808 = vmatpush1.msra.mxu0 %v653
      %809 = vmatprep.subr.mxu0 0.0
      %810 = vmatpush1.msra.mxu0 %v652
      %811 = vmatprep.subr.mxu0 0.0
      %812 = vmatpush1.msra.mxu0 %v651
      %813 = vmatprep.subr.mxu0 0.0
      %814 = vmatpush1.msra.mxu0 %v650
      %815 = vmatprep.subr.mxu0 0.0
      %816 = vmatpush1.msra.mxu0 %v649
      %817 = vmatprep.subr.mxu0 0.0
      %818 = vmatpush1.msra.mxu0 %v648
      %819 = vmatprep.subr.mxu0 0.0
      %820 = vmatpush1.msra.mxu0 %v647
      %821 = vmatprep.subr.mxu0 0.0
      %822 = vmatpush1.msra.mxu0 %v646
      %823 = vmatprep.subr.mxu0 0.0
      %824 = vmatpush2.msra.mxu0 0.0
      %825 = vmatprep.subr.mxu0 0.0
      %826 = vmatpush2.msra.mxu0 0.0
      %827 = vmatprep.subr.mxu0 0.0
      %828 = vmatpush2.msra.mxu0 0.0
      %829 = vmatprep.subr.mxu0 0.0
      %830 = vmatpush2.msra.mxu0 0.0
      %831 = vmatprep.subr.mxu0 0.0
      %832 = vmatpush2.msra.mxu0 0.0
      %833 = vmatprep.subr.mxu0 0.0
      %834 = vmatpush2.msra.mxu0 0.0
      %835 = vmatprep.subr.mxu0 0.0
      %836 = vmatpush2.msra.mxu0 0.0
      %837 = vmatprep.subr.mxu0 0.0
      %838 = vmatpush2.msra.mxu0 0.0
      %839 = vmatprep.subr.mxu0 0.0
      %840 = vmatpush2.msra.mxu0 0.0
      %841 = vmatprep.subr.mxu0 0.0
      %842 = vmatpush2.msra.mxu0 0.0
      %843 = vmatprep.subr.mxu0 0.0
      %844 = vmatpush2.msra.mxu0 0.0
      %845 = vmatprep.subr.mxu0 0.0
      %846 = vmatpush2.msra.mxu0 0.0
      %847 = vmatprep.subr.mxu0 0.0
      %848 = vmatpush2.msra.mxu0 0.0
      %849 = vmatprep.subr.mxu0 0.0
      %850 = vmatpush2.msra.mxu0 0.0
      %851 = vmatprep.subr.mxu0 0.0
      %852 = vmatpush2.msra.mxu0 %v663
      %853 = vmatprep.subr.mxu0 0.0
      %854 = vmatpush2.msra.mxu0 %v662
      %855 = vmatprep.mubr.f32.mxu0 %v787
      %856 = vmatmul.mubr.f32.gmra.mxu0 %v642
      %v857 = vpop.f32.mrf.mxu0
      %v858 = vadd.f32 %v778, %v857
      %v859 = vpop.f32.mrf.mxu0
      %860 = vmatprep.mubr.f32.mxu0 %v789
      %861 = vmatmul.mubr.f32.gmra.mxu0 %v644
      %v862 = vpop.f32.mrf.mxu0
      %v863 = vadd.f32 %v783, %v862
      %v864 = vpop.f32.mrf.mxu0
      %865 = vdwg.mxu0
      %v866 = vld [vmem:[#allocation3] sm:$0xfc]
      %v867 = vld [vmem:[#allocation3 + $0x8] sm:$0xfc]
      %v868 = vld [vmem:[#allocation3 + $0x20] sm:$0x3]
      %v869 = vld [vmem:[#allocation3 + $0x28] sm:$0x3]
      %s870 = scalar_lea.vmem %s3, 288
      %v871 = vld [vmem:[%s870] sm:$0xff]
      %v872 = vld [vmem:[%s870 + $0x8] sm:$0xff]
      %v873 = vld [vmem:[%s870 + $0x10] sm:$0xff]
      %v874 = vld [vmem:[%s870 + $0x18] sm:$0xff]
      %v875 = vld [vmem:[%s870 + $0x20] sm:$0xff]
      %v876 = vld [vmem:[%s870 + $0x28] sm:$0xff]
      %v877 = vld [vmem:[%s870 + $0x30] sm:$0xff]
      %v878 = vld [vmem:[%s870 + $0x38] sm:$0xff]
      %v879 = vld [vmem:[%s870 + $0x40] sm:$0xff]
      %v880 = vld [vmem:[%s870 + $0x48] sm:$0xff]
      %v881 = vld [vmem:[%s870 + $0x50] sm:$0xff]
      %v882 = vld [vmem:[%s870 + $0x58] sm:$0xff]
      %v883 = vld [vmem:[%s870 + $0x60] sm:$0xff]
      %v884 = vld [vmem:[%s870 + $0x68] sm:$0xff]
      %v885 = vld [vmem:[%s870 + $0x70] sm:$0xff]
      %v886 = vld [vmem:[%s870 + $0x78] sm:$0xff]
      %v887 = vld [vmem:[%s870 + $0x80] sm:$0xff]
      %v888 = vld [vmem:[%s870 + $0x88] sm:$0xff]
      %vm893 = vcmask 1045504
      %v894 = vrot.slane %v866, 2
      %v895 = vrot.slane %v644, 2
      %v896 = vsel %vm893, %v894, %v895
      %v897 = vrot.slane %v867, 2
      %v898 = vrot.slane %v645, 2
      %v899 = vsel %vm893, %v897, %v898
      %v900 = vrot.slane %v868, 2
      %v901 = vsel %vm893, %v895, %v900
      %v902 = vrot.slane %v869, 2
      %v903 = vsel %vm893, %v898, %v902
      %v906 = vsel %vm706, %v899, 0
      %v908 = vsel %vm706, %v903, 0
      %910 = vmatprep.subr.mxu0 0.0
      %911 = vmatpush1.msra.mxu0 %v886
      %912 = vmatprep.subr.mxu0 0.0
      %913 = vmatpush1.msra.mxu0 %v885
      %914 = vmatprep.subr.mxu0 0.0
      %915 = vmatpush1.msra.mxu0 %v884
      %916 = vmatprep.subr.mxu0 0.0
      %917 = vmatpush1.msra.mxu0 %v883
      %918 = vmatprep.subr.mxu0 0.0
      %919 = vmatpush1.msra.mxu0 %v882
      %920 = vmatprep.subr.mxu0 0.0
      %921 = vmatpush1.msra.mxu0 %v881
      %922 = vmatprep.subr.mxu0 0.0
      %923 = vmatpush1.msra.mxu0 %v880
      %924 = vmatprep.subr.mxu0 0.0
      %925 = vmatpush1.msra.mxu0 %v879
      %926 = vmatprep.subr.mxu0 0.0
      %927 = vmatpush1.msra.mxu0 %v878
      %928 = vmatprep.subr.mxu0 0.0
      %929 = vmatpush1.msra.mxu0 %v877
      %930 = vmatprep.subr.mxu0 0.0
      %931 = vmatpush1.msra.mxu0 %v876
      %932 = vmatprep.subr.mxu0 0.0
      %933 = vmatpush1.msra.mxu0 %v875
      %934 = vmatprep.subr.mxu0 0.0
      %935 = vmatpush1.msra.mxu0 %v874
      %936 = vmatprep.subr.mxu0 0.0
      %937 = vmatpush1.msra.mxu0 %v873
      %938 = vmatprep.subr.mxu0 0.0
      %939 = vmatpush1.msra.mxu0 %v872
      %940 = vmatprep.subr.mxu0 0.0
      %941 = vmatpush1.msra.mxu0 %v871
      %942 = vmatprep.subr.mxu0 0.0
      %943 = vmatpush2.msra.mxu0 0.0
      %944 = vmatprep.subr.mxu0 0.0
      %945 = vmatpush2.msra.mxu0 0.0
      %946 = vmatprep.subr.mxu0 0.0
      %947 = vmatpush2.msra.mxu0 0.0
      %948 = vmatprep.subr.mxu0 0.0
      %949 = vmatpush2.msra.mxu0 0.0
      %950 = vmatprep.subr.mxu0 0.0
      %951 = vmatpush2.msra.mxu0 0.0
      %952 = vmatprep.subr.mxu0 0.0
      %953 = vmatpush2.msra.mxu0 0.0
      %954 = vmatprep.subr.mxu0 0.0
      %955 = vmatpush2.msra.mxu0 0.0
      %956 = vmatprep.subr.mxu0 0.0
      %957 = vmatpush2.msra.mxu0 0.0
      %958 = vmatprep.subr.mxu0 0.0
      %959 = vmatpush2.msra.mxu0 0.0
      %960 = vmatprep.subr.mxu0 0.0
      %961 = vmatpush2.msra.mxu0 0.0
      %962 = vmatprep.subr.mxu0 0.0
      %963 = vmatpush2.msra.mxu0 0.0
      %964 = vmatprep.subr.mxu0 0.0
      %965 = vmatpush2.msra.mxu0 0.0
      %966 = vmatprep.subr.mxu0 0.0
      %967 = vmatpush2.msra.mxu0 0.0
      %968 = vmatprep.subr.mxu0 0.0
      %969 = vmatpush2.msra.mxu0 0.0
      %970 = vmatprep.subr.mxu0 0.0
      %971 = vmatpush2.msra.mxu0 %v888
      %972 = vmatprep.subr.mxu0 0.0
      %973 = vmatpush2.msra.mxu0 %v887
      %974 = vmatprep.mubr.f32.mxu0 %v906
      %975 = vmatmul.mubr.f32.gmra.mxu0 %v896
      %v976 = vpop.f32.mrf.mxu0
      %v977 = vadd.f32 0.0, %v976
      %v978 = vpop.f32.mrf.mxu0
      %979 = vmatprep.mubr.f32.mxu0 %v908
      %980 = vmatmul.mubr.f32.gmra.mxu0 %v901
      %v981 = vpop.f32.mrf.mxu0
      %v982 = vadd.f32 0.0, %v981
      %v983 = vpop.f32.mrf.mxu0
      %984 = vdwg.mxu0
      %v985 = vadd.f32 %v858, %v977
      %v986 = vadd.f32 %v863, %v982
      %v987 = vld [vmem:[%s4] sm:$0x1]
      %v989 = vlaneseq
      %v990 = vshrl.u32 %v989, 7
      %v991 = vsub.s32 0, %v990
      %v992 = vrot.slane %v987, %v991
      %v994 = vadd.f32 %v985, %v992
      %v995 = vadd.f32 %v986, %v992
      %v996 = vmax.f32 %v994, 0.0
      %v997 = vmax.f32 %v995, 0.0
      %vm998 = vcmp.lt.s32.totalorder %v597, 136
      %vm999 = vmand %vm598, %vm998
      %s1000 = scalar_lea.vmem [#allocation4], 32
      %1001 = vst.msk [vmem:[%s1000] ss:$8 sm:$0x3] %vm999, 0.0
      %1002 = vst.msk [vmem:[%s1000] ss:$8 sm:$0x0] %vm999, 0.0
      %1003 = vst.msk [vmem:[#allocation4 + $0x8] sm:$0xff] %vm606, 0.0
      %1004 = vst.msk [vmem:[#allocation4 + $0x18] sm:$0xff] %vm606, 0.0
      %1005 = vst.msk [vmem:[#allocation4 + $0x28] sm:$0x1] %vm640, 0.0
      %1006 = vst [vmem:[#allocation4] sm:$0xff] %v996
      %1007 = vst [vmem:[#allocation4 + $0x10] sm:$0xff] %v997
      %v1008 = vld [vmem:[#allocation4] sm:$0xff]
      %v1009 = vld [vmem:[#allocation4 + $0x8] sm:$0xff]
      %v1010 = vld [vmem:[#allocation4 + $0x10] sm:$0xff]
      %v1011 = vld [vmem:[#allocation4 + $0x18] sm:$0xff]
      %v1012 = vld [vmem:[%s5] sm:$0xff]
      %v1013 = vld [vmem:[%s5 + $0x8] sm:$0xff]
      %v1014 = vld [vmem:[%s5 + $0x10] sm:$0xff]
      %v1015 = vld [vmem:[%s5 + $0x18] sm:$0xff]
      %v1016 = vld [vmem:[%s5 + $0x20] sm:$0xff]
      %v1017 = vld [vmem:[%s5 + $0x28] sm:$0xff]
      %v1018 = vld [vmem:[%s5 + $0x30] sm:$0xff]
      %v1019 = vld [vmem:[%s5 + $0x38] sm:$0xff]
      %v1020 = vld [vmem:[%s5 + $0x40] sm:$0xff]
      %v1021 = vld [vmem:[%s5 + $0x48] sm:$0xff]
      %v1022 = vld [vmem:[%s5 + $0x50] sm:$0xff]
      %v1023 = vld [vmem:[%s5 + $0x58] sm:$0xff]
      %v1024 = vld [vmem:[%s5 + $0x60] sm:$0xff]
      %v1025 = vld [vmem:[%s5 + $0x68] sm:$0xff]
      %v1026 = vld [vmem:[%s5 + $0x70] sm:$0xff]
      %v1027 = vld [vmem:[%s5 + $0x78] sm:$0xff]
      %v1028 = vld [vmem:[%s5 + $0x80] sm:$0xff]
      %v1029 = vld [vmem:[%s5 + $0x88] sm:$0xff]
      %v1030 = vld [vmem:[%s5 + $0x90] sm:$0xff]
      %v1031 = vld [vmem:[%s5 + $0x98] sm:$0xff]
      %v1032 = vld [vmem:[%s5 + $0xa0] sm:$0xff]
      %v1033 = vld [vmem:[%s5 + $0xa8] sm:$0xff]
      %v1034 = vld [vmem:[%s5 + $0xb0] sm:$0xff]
      %v1035 = vld [vmem:[%s5 + $0xb8] sm:$0xff]
      %v1036 = vld [vmem:[%s5 + $0xc0] sm:$0xff]
      %v1037 = vld [vmem:[%s5 + $0xc8] sm:$0xff]
      %v1038 = vld [vmem:[%s5 + $0xd0] sm:$0xff]
      %v1039 = vld [vmem:[%s5 + $0xd8] sm:$0xff]
      %v1040 = vld [vmem:[%s5 + $0xe0] sm:$0xff]
      %v1041 = vld [vmem:[%s5 + $0xe8] sm:$0xff]
      %v1042 = vld [vmem:[%s5 + $0xf0] sm:$0xff]
      %v1043 = vld [vmem:[%s5 + $0xf8] sm:$0xff]
      %v1044 = vld [vmem:[%s5 + $0x100] sm:$0xff]
      %v1045 = vld [vmem:[%s5 + $0x108] sm:$0xff]
      %v1046 = vld [vmem:[#allocation4] sm:$0xfe]
      %v1047 = vld [vmem:[#allocation4 + $0x8] sm:$0xfe]
      %v1048 = vld [vmem:[#allocation4 + $0x20] sm:$0x1]
      %v1049 = vld [vmem:[#allocation4 + $0x28] sm:$0x1]
      %s1050 = scalar_lea.vmem %s5, 272
      %v1051 = vld [vmem:[%s1050] sm:$0xff]
      %v1052 = vld [vmem:[%s1050 + $0x8] sm:$0xff]
      %v1053 = vld [vmem:[%s1050 + $0x10] sm:$0xff]
      %v1054 = vld [vmem:[%s1050 + $0x18] sm:$0xff]
      %v1055 = vld [vmem:[%s1050 + $0x20] sm:$0xff]
      %v1056 = vld [vmem:[%s1050 + $0x28] sm:$0xff]
      %v1057 = vld [vmem:[%s1050 + $0x30] sm:$0xff]
      %v1058 = vld [vmem:[%s1050 + $0x38] sm:$0xff]
      %v1059 = vld [vmem:[%s1050 + $0x40] sm:$0xff]
      %v1060 = vld [vmem:[%s1050 + $0x48] sm:$0xff]
      %v1061 = vld [vmem:[%s1050 + $0x50] sm:$0xff]
      %v1062 = vld [vmem:[%s1050 + $0x58] sm:$0xff]
      %v1063 = vld [vmem:[%s1050 + $0x60] sm:$0xff]
      %v1064 = vld [vmem:[%s1050 + $0x68] sm:$0xff]
      %v1065 = vld [vmem:[%s1050 + $0x70] sm:$0xff]
      %v1066 = vld [vmem:[%s1050 + $0x78] sm:$0xff]
      %v1067 = vld [vmem:[%s1050 + $0x80] sm:$0xff]
      %v1068 = vld [vmem:[%s1050 + $0x88] sm:$0xff]
      %v1069 = vld [vmem:[%s1050 + $0x90] sm:$0xff]
      %v1070 = vld [vmem:[%s1050 + $0x98] sm:$0xff]
      %v1071 = vld [vmem:[%s1050 + $0xa0] sm:$0xff]
      %v1072 = vld [vmem:[%s1050 + $0xa8] sm:$0xff]
      %v1073 = vld [vmem:[%s1050 + $0xb0] sm:$0xff]
      %v1074 = vld [vmem:[%s1050 + $0xb8] sm:$0xff]
      %v1075 = vld [vmem:[%s1050 + $0xc0] sm:$0xff]
      %v1076 = vld [vmem:[%s1050 + $0xc8] sm:$0xff]
      %v1077 = vld [vmem:[%s1050 + $0xd0] sm:$0xff]
      %v1078 = vld [vmem:[%s1050 + $0xd8] sm:$0xff]
      %v1079 = vld [vmem:[%s1050 + $0xe0] sm:$0xff]
      %v1080 = vld [vmem:[%s1050 + $0xe8] sm:$0xff]
      %v1081 = vld [vmem:[%s1050 + $0xf0] sm:$0xff]
      %v1082 = vld [vmem:[%s1050 + $0xf8] sm:$0xff]
      %v1083 = vld [vmem:[%s1050 + $0x100] sm:$0xff]
      %v1084 = vld [vmem:[%s1050 + $0x108] sm:$0xff]
      %v1091 = vrot.slane %v1046, 1
      %v1092 = vrot.slane %v1010, 1
      %v1093 = vsel %vm693, %v1091, %v1092
      %v1094 = vrot.slane %v1047, 1
      %v1095 = vrot.slane %v1011, 1
      %v1096 = vsel %vm693, %v1094, %v1095
      %v1097 = vrot.slane %v1048, 1
      %v1098 = vsel %vm693, %v1092, %v1097
      %v1099 = vrot.slane %v1049, 1
      %v1100 = vsel %vm693, %v1095, %v1099
      %v1103 = vsel %vm606, %v1096, 0
      %v1105 = vsel %vm606, %v1100, 0
      %1107 = vmatprep.subr.mxu0 %v1082
      %1108 = vmatpush1.msra.mxu0 %v1081
      %1109 = vmatprep.subr.mxu0 %v1080
      %1110 = vmatpush1.msra.mxu0 %v1079
      %1111 = vmatprep.subr.mxu0 %v1078
      %1112 = vmatpush1.msra.mxu0 %v1077
      %1113 = vmatprep.subr.mxu0 %v1076
      %1114 = vmatpush1.msra.mxu0 %v1075
      %1115 = vmatprep.subr.mxu0 %v1074
      %1116 = vmatpush1.msra.mxu0 %v1073
      %1117 = vmatprep.subr.mxu0 %v1072
      %1118 = vmatpush1.msra.mxu0 %v1071
      %1119 = vmatprep.subr.mxu0 %v1070
      %1120 = vmatpush1.msra.mxu0 %v1069
      %1121 = vmatprep.subr.mxu0 %v1068
      %1122 = vmatpush1.msra.mxu0 %v1067
      %1123 = vmatprep.subr.mxu0 %v1066
      %1124 = vmatpush1.msra.mxu0 %v1065
      %1125 = vmatprep.subr.mxu0 %v1064
      %1126 = vmatpush1.msra.mxu0 %v1063
      %1127 = vmatprep.subr.mxu0 %v1062
      %1128 = vmatpush1.msra.mxu0 %v1061
      %1129 = vmatprep.subr.mxu0 %v1060
      %1130 = vmatpush1.msra.mxu0 %v1059
      %1131 = vmatprep.subr.mxu0 %v1058
      %1132 = vmatpush1.msra.mxu0 %v1057
      %1133 = vmatprep.subr.mxu0 %v1056
      %1134 = vmatpush1.msra.mxu0 %v1055
      %1135 = vmatprep.subr.mxu0 %v1054
      %1136 = vmatpush1.msra.mxu0 %v1053
      %1137 = vmatprep.subr.mxu0 %v1052
      %1138 = vmatpush1.msra.mxu0 %v1051
      %1139 = vmatprep.subr.mxu0 0.0
      %1140 = vmatpush2.msra.mxu0 0.0
      %1141 = vmatprep.subr.mxu0 0.0
      %1142 = vmatpush2.msra.mxu0 0.0
      %1143 = vmatprep.subr.mxu0 0.0
      %1144 = vmatpush2.msra.mxu0 0.0
      %1145 = vmatprep.subr.mxu0 0.0
      %1146 = vmatpush2.msra.mxu0 0.0
      %1147 = vmatprep.subr.mxu0 0.0
      %1148 = vmatpush2.msra.mxu0 0.0
      %1149 = vmatprep.subr.mxu0 0.0
      %1150 = vmatpush2.msra.mxu0 0.0
      %1151 = vmatprep.subr.mxu0 0.0
      %1152 = vmatpush2.msra.mxu0 0.0
      %1153 = vmatprep.subr.mxu0 0.0
      %1154 = vmatpush2.msra.mxu0 0.0
      %1155 = vmatprep.subr.mxu0 0.0
      %1156 = vmatpush2.msra.mxu0 0.0
      %1157 = vmatprep.subr.mxu0 0.0
      %1158 = vmatpush2.msra.mxu0 0.0
      %1159 = vmatprep.subr.mxu0 0.0
      %1160 = vmatpush2.msra.mxu0 0.0
      %1161 = vmatprep.subr.mxu0 0.0
      %1162 = vmatpush2.msra.mxu0 0.0
      %1163 = vmatprep.subr.mxu0 0.0
      %1164 = vmatpush2.msra.mxu0 0.0
      %1165 = vmatprep.subr.mxu0 0.0
      %1166 = vmatpush2.msra.mxu0 0.0
      %1167 = vmatprep.subr.mxu0 0.0
      %1168 = vmatpush2.msra.mxu0 0.0
      %1169 = vmatprep.subr.mxu0 %v1084
      %1170 = vmatpush2.msra.mxu0 %v1083
      %1171 = vmatprep.mubr.f32.mxu0 %v1103
      %1172 = vmatmul.mubr.f32.gmra.mxu0 %v1093
      %v1173 = vpop.f32.mrf.mxu0
      %v1174 = vadd.f32 0.0, %v1173
      %v1175 = vpop.f32.mrf.mxu0
      %v1176 = vadd.f32 0.0, %v1175
      %1177 = vmatprep.mubr.f32.mxu0 %v1105
      %1178 = vmatmul.mubr.f32.gmra.mxu0 %v1098
      %v1179 = vpop.f32.mrf.mxu0
      %v1180 = vadd.f32 0.0, %v1179
      %v1181 = vpop.f32.mrf.mxu0
      %v1182 = vadd.f32 0.0, %v1181
      %1183 = vdwg.mxu0
      %v1185 = vsel %vm606, %v1009, 0
      %v1187 = vsel %vm606, %v1011, 0
      %1189 = vmatprep.subr.mxu0 %v1043
      %1190 = vmatpush1.msra.mxu0 %v1042
      %1191 = vmatprep.subr.mxu0 %v1041
      %1192 = vmatpush1.msra.mxu0 %v1040
      %1193 = vmatprep.subr.mxu0 %v1039
      %1194 = vmatpush1.msra.mxu0 %v1038
      %1195 = vmatprep.subr.mxu0 %v1037
      %1196 = vmatpush1.msra.mxu0 %v1036
      %1197 = vmatprep.subr.mxu0 %v1035
      %1198 = vmatpush1.msra.mxu0 %v1034
      %1199 = vmatprep.subr.mxu0 %v1033
      %1200 = vmatpush1.msra.mxu0 %v1032
      %1201 = vmatprep.subr.mxu0 %v1031
      %1202 = vmatpush1.msra.mxu0 %v1030
      %1203 = vmatprep.subr.mxu0 %v1029
      %1204 = vmatpush1.msra.mxu0 %v1028
      %1205 = vmatprep.subr.mxu0 %v1027
      %1206 = vmatpush1.msra.mxu0 %v1026
      %1207 = vmatprep.subr.mxu0 %v1025
      %1208 = vmatpush1.msra.mxu0 %v1024
      %1209 = vmatprep.subr.mxu0 %v1023
      %1210 = vmatpush1.msra.mxu0 %v1022
      %1211 = vmatprep.subr.mxu0 %v1021
      %1212 = vmatpush1.msra.mxu0 %v1020
      %1213 = vmatprep.subr.mxu0 %v1019
      %1214 = vmatpush1.msra.mxu0 %v1018
      %1215 = vmatprep.subr.mxu0 %v1017
      %1216 = vmatpush1.msra.mxu0 %v1016
      %1217 = vmatprep.subr.mxu0 %v1015
      %1218 = vmatpush1.msra.mxu0 %v1014
      %1219 = vmatprep.subr.mxu0 %v1013
      %1220 = vmatpush1.msra.mxu0 %v1012
      %1221 = vmatprep.subr.mxu0 0.0
      %1222 = vmatpush2.msra.mxu0 0.0
      %1223 = vmatprep.subr.mxu0 0.0
      %1224 = vmatpush2.msra.mxu0 0.0
      %1225 = vmatprep.subr.mxu0 0.0
      %1226 = vmatpush2.msra.mxu0 0.0
      %1227 = vmatprep.subr.mxu0 0.0
      %1228 = vmatpush2.msra.mxu0 0.0
      %1229 = vmatprep.subr.mxu0 0.0
      %1230 = vmatpush2.msra.mxu0 0.0
      %1231 = vmatprep.subr.mxu0 0.0
      %1232 = vmatpush2.msra.mxu0 0.0
      %1233 = vmatprep.subr.mxu0 0.0
      %1234 = vmatpush2.msra.mxu0 0.0
      %1235 = vmatprep.subr.mxu0 0.0
      %1236 = vmatpush2.msra.mxu0 0.0
      %1237 = vmatprep.subr.mxu0 0.0
      %1238 = vmatpush2.msra.mxu0 0.0
      %1239 = vmatprep.subr.mxu0 0.0
      %1240 = vmatpush2.msra.mxu0 0.0
      %1241 = vmatprep.subr.mxu0 0.0
      %1242 = vmatpush2.msra.mxu0 0.0
      %1243 = vmatprep.subr.mxu0 0.0
      %1244 = vmatpush2.msra.mxu0 0.0
      %1245 = vmatprep.subr.mxu0 0.0
      %1246 = vmatpush2.msra.mxu0 0.0
      %1247 = vmatprep.subr.mxu0 0.0
      %1248 = vmatpush2.msra.mxu0 0.0
      %1249 = vmatprep.subr.mxu0 0.0
      %1250 = vmatpush2.msra.mxu0 0.0
      %1251 = vmatprep.subr.mxu0 %v1045
      %1252 = vmatpush2.msra.mxu0 %v1044
      %1253 = vmatprep.mubr.f32.mxu0 %v1185
      %1254 = vmatmul.mubr.f32.gmra.mxu0 %v1008
      %v1255 = vpop.f32.mrf.mxu0
      %v1256 = vadd.f32 %v1174, %v1255
      %v1257 = vpop.f32.mrf.mxu0
      %v1258 = vadd.f32 %v1176, %v1257
      %1259 = vmatprep.mubr.f32.mxu0 %v1187
      %1260 = vmatmul.mubr.f32.gmra.mxu0 %v1010
      %v1261 = vpop.f32.mrf.mxu0
      %v1262 = vadd.f32 %v1180, %v1261
      %v1263 = vpop.f32.mrf.mxu0
      %v1264 = vadd.f32 %v1182, %v1263
      %1265 = vdwg.mxu0
      %v1266 = vld [vmem:[%s6] sm:$0x3]
      %v1268 = vlaneseq
      %v1269 = vshrl.u32 %v1268, 7
      %v1270 = vsub.s32 0, %v1269
      %v1271 = vrot.slane %v1266, %v1270
      %v1272 = vlaneseq
      %v1273 = vshrl.u32 %v1272, 7
      %v1274 = vsub.s32 1, %v1273
      %v1275 = vrot.slane %v1266, %v1274
      %v1278 = vadd.f32 %v1256, %v1271
      %v1279 = vadd.f32 %v1258, %v1275
      %v1280 = vadd.f32 %v1262, %v1271
      %v1281 = vadd.f32 %v1264, %v1275
      %v1282 = vmax.f32 %v1278, 0.0
      %v1283 = vmax.f32 %v1279, 0.0
      %v1284 = vmax.f32 %v1280, 0.0
      %v1285 = vmax.f32 %v1281, 0.0
      %1286 = vst [vmem:[%s278] sm:$0xff] %v1282
      %1287 = vst [vmem:[%s278 + $0x8] sm:$0xff] %v1283
      %1288 = vst [vmem:[%s278 + $0x10] sm:$0xff] %v1284
      %1289 = vst [vmem:[%s278 + $0x18] sm:$0xff] %v1285
      %p1290 = scmp.lt.s32.totalorder %s18, 1
      %s1291 = scalar_select %p1290, %s18, 1
      %s1292 = smul.addr %s1291, 4
      %s1293 = smul.addr %s1292, 8
      %s1294 = scalar_lea.vmem %s7, %s1293
      // Predicated region
      $region49: #{upsample_layer_forward.1} parent=47 // pred_check
        %p1295 = pneg %p188
      $region50: #{upsample_layer_forward.1} parent=47 // pred_check_branch
        %1297 = sbr.rel (%p1295) target = $region52
      $region51: #{upsample_layer_forward.1} parent=47 // pred_region
        _
      $region52: #{upsample_layer_forward.1} parent=47 // pred_fallthru
        _
    $region48: #{upsample_layer_forward.1} parent=5 // pred_fallthru
      _
    %p1298 = scmp.le.s32.totalorder 2, %s13
    // Predicated region
    $region53: #{upsample_layer_forward.1} parent=5 // pred_check
      %p1299 = pneg %p1298
    $region54: #{upsample_layer_forward.1} parent=5 // pred_check_branch
      %1301 = sbr.rel (%p1299) target = $region56
    $region55: #{upsample_layer_forward.1} parent=5 // pred_region
      %s1302 = ssub.s32 %s13, 2
      // Predicated region
      $region57: #{upsample_layer_forward.1} parent=55 // pred_check
        %p1303 = pneg %p194
      $region58: #{upsample_layer_forward.1} parent=55 // pred_check_branch
        %1305 = sbr.rel (%p1303) target = $region60
      $region59: #{upsample_layer_forward.1} parent=55 // pred_region
        %p1306 = scmp.lt.s32.totalorder %s19, 1
        %s1307 = scalar_select %p1306, %s19, 1
        %s1308 = smul.addr %s1307, 4
        %s1309 = smul.addr %s1308, 8
        %s1310 = scalar_lea.vmem %s7, %s1309
      $region60: #{upsample_layer_forward.1} parent=55 // pred_fallthru
        _
    $region56: #{upsample_layer_forward.1} parent=5 // pred_fallthru
      _
  $region6: #{upsample_layer_forward.1} parent=0 // loop_footer
    %s17 = sadd.s32 1, %s13
  $region7: #{upsample_layer_forward.1} parent=0 // loop_footer_branch
    %12 = sbr.rel target = $region3
  $region8: #{upsample_layer_forward.1} parent=0 // loop_exit
    _

</llo_original>
